<compile_context>
chip_gen: v7x
topology: tpu7x:2x2x1
jax: 0.10.0
libtpu: 0.0.40
codegen_flags: <defaults>
</compile_context>

<pallas_src>
import functools

import jax
import jax.numpy as jnp
from jax import lax
from jax.experimental import pallas as pl
from jax.experimental.pallas import tpu as pltpu


def sa_layer_kernel(x_ref, wq_ref, wv_ref, bv_ref, wt_ref, bt_ref,
                    gamma_ref, beta_ref, o_ref, d_ref, *, B, N):
    C = x_ref.shape[0]

    xf = x_ref[...]           # (C, B*N)
    wq = wq_ref[...]          # (C//4, C)  shared q/k weight (no bias)
    wv = wv_ref[...]          # (C, C)
    bv = bv_ref[...]          # (C, 1)
    wt = wt_ref[...]          # (C, C)
    bt = bt_ref[...]          # (C, 1)
    gamma = gamma_ref[...]    # (C, 1)
    beta = beta_ref[...]      # (C, 1)

    # Fused 1x1-conv matmuls across all batches at once (256-lane-wide RHS).
    q = jnp.dot(wq, xf, preferred_element_type=jnp.float32)        # (C//4, B*N)
    v = jnp.dot(wv, xf, preferred_element_type=jnp.float32) + bv   # (C, B*N)

    # Per-batch (N, N) attention block.  B is tiny (2) so a static unroll is fine;
    # the per-batch result goes straight to VMEM scratch so energy/e/attn vregs do
    # not stay live across batch iterations.
    # TODO(synk): for B > 2 convert to lax.fori_loop / a grid axis with accumulators.
    for b in range(B):
        lo, hi = b * N, (b + 1) * N            # aligned 128-lane boundaries
        qb = q[:, lo:hi]                        # (C//4, N)
        vb = v[:, lo:hi]                        # (C, N)
        xb = xf[:, lo:hi]                       # (C, N)

        # energy[n, m] = sum_d q[d, n] * q[d, m]   (== x_q @ x_k, weights shared)
        energy = lax.dot_general(qb, qb, (((0,), (0,)), ((), ())),
                                 preferred_element_type=jnp.float32)   # (N, N)

        # softmax over last dim (reciprocal-multiply instead of VPU divide)
        e = jnp.exp(energy - jnp.max(energy, axis=-1, keepdims=True))
        attn = e * pl.reciprocal(jnp.sum(e, axis=-1, keepdims=True), approx=False)

        # PyTorch: attention / (1e-9 + attention.sum(dim=1, keepdim=True)).
        # The column scale commutes through the contraction over n, so apply it to
        # the (C, N) x_r tile after the matmul instead of the (N, N) attention tile.
        colsum = jnp.sum(attn, axis=0, keepdims=True)                  # (1, N)
        x_r = jnp.dot(vb, attn, preferred_element_type=jnp.float32)    # (C, N)
        x_r = x_r * pl.reciprocal(1e-9 + colsum, approx=False)

        d_ref[:, lo:hi] = xb - x_r

    # Single fused trans_conv matmul over the 256-lane tile.
    t = jnp.dot(wt, d_ref[...], preferred_element_type=jnp.float32) + bt   # (C, B*N)

    # BatchNorm1d training-mode stats over (B, N) == one lane-axis reduction over
    # the fused 256-lane tile (biased variance, eps=1e-5).
    cnt = float(B * N)
    mean = jnp.sum(t, axis=-1, keepdims=True) / cnt
    var = jnp.sum(t * t, axis=-1, keepdims=True) / cnt - mean * mean
    inv = lax.rsqrt(var + 1e-5)
    tn = (t - mean) * inv * gamma + beta

    # Residual + ReLU, lane-dense 256-wide store.
    o_ref[...] = xf + jnp.maximum(tn, 0.0)


@jax.jit
def sa_layer(x, wq, wv, bv, wt, bt, gamma, beta):
    B, C, N = x.shape
    # Layout plumbing in the wrapper: (B, C, N) -> (C, B*N), point/batch on lanes.
    x_f = jnp.transpose(x, (1, 0, 2)).reshape(C, B * N)

    vm = pl.BlockSpec(memory_space=pltpu.MemorySpace.VMEM)
    o_f = pl.pallas_call(
        functools.partial(sa_layer_kernel, B=B, N=N),
        out_shape=jax.ShapeDtypeStruct((C, B * N), x.dtype),
        in_specs=[vm] * 8,
        out_specs=vm,
        scratch_shapes=[pltpu.VMEM((C, B * N), jnp.float32)],
    )(x_f, wq, wv, bv, wt, bt, gamma, beta)

    return jnp.transpose(o_f.reshape(C, B, N), (1, 0, 2))


def sa_layer_ref(x, wq, wv, bv, wt, bt, gamma, beta):
    """Pure-JAX reference mirroring the PyTorch forward."""
    q = jnp.einsum('dc,bcn->bdn', wq, x)                    # (B, C//4, N)
    k = q                                                   # shared weights, no bias
    v = jnp.einsum('oc,bcn->bon', wv, x) + bv[None]         # (B, C, N)
    energy = jnp.einsum('bdn,bdm->bnm', q, k)               # (B, N, N)
    attn = jax.nn.softmax(energy, axis=-1)
    attn = attn / (1e-9 + jnp.sum(attn, axis=1, keepdims=True))
    x_r = jnp.einsum('bcn,bnm->bcm', v, attn)               # (B, C, N)
    t = jnp.einsum('oc,bcn->bon', wt, x - x_r) + bt[None]
    mean = jnp.mean(t, axis=(0, 2), keepdims=True)
    var = jnp.mean((t - mean) ** 2, axis=(0, 2), keepdims=True)
    tn = (t - mean) * lax.rsqrt(var + 1e-5) * gamma[None] + beta[None]
    return x + jnp.maximum(tn, 0.0)


if __name__ == "__main__":
    # SA_Layer(128) as used in get_model; small point count, B*N = 256 lanes.
    B, C, N = 2, 128, 128
    C4 = C // 4

    key = jax.random.PRNGKey(0)
    kx, kq, kv, kbv, kt, kbt = jax.random.split(key, 6)

    x = jax.random.normal(kx, (B, C, N), jnp.float32)

    # Deterministic synthetic parameters (shapes per nn.Conv1d / nn.BatchNorm1d init).
    wq = 0.1 * jax.random.normal(kq, (C4, C), jnp.float32)    # shared q/k weight, no bias
    wv = 0.1 * jax.random.normal(kv, (C, C), jnp.float32)
    bv = 0.1 * jax.random.normal(kbv, (C, 1), jnp.float32)
    wt = 0.1 * jax.random.normal(kt, (C, C), jnp.float32)
    bt = 0.1 * jax.random.normal(kbt, (C, 1), jnp.float32)
    gamma = jnp.ones((C, 1), jnp.float32)                     # BN weight init
    beta = jnp.zeros((C, 1), jnp.float32)                     # BN bias init

    out = sa_layer(x, wq, wv, bv, wt, bt, gamma, beta)
    out = jax.block_until_ready(out)

    ref = sa_layer_ref(x, wq, wv, bv, wt, bt, gamma, beta)
    assert out.shape == (B, C, N)
    assert jnp.allclose(out, ref, rtol=1e-4, atol=1e-4), "mismatch vs JAX reference"

    print("KERNEL_OK")
</pallas_src>

<mosaic_0001>
module attributes {stable_mosaic.version = 11 : i64} {
  func.func @sa_layer_kernel(%arg0: memref<128x256xf32, #tpu.memory_space<vmem>>, %arg1: memref<32x128xf32, #tpu.memory_space<vmem>>, %arg2: memref<128x128xf32, #tpu.memory_space<vmem>>, %arg3: memref<128x1xf32, #tpu.memory_space<vmem>>, %arg4: memref<128x128xf32, #tpu.memory_space<vmem>>, %arg5: memref<128x1xf32, #tpu.memory_space<vmem>>, %arg6: memref<128x1xf32, #tpu.memory_space<vmem>>, %arg7: memref<128x1xf32, #tpu.memory_space<vmem>>, %arg8: memref<128x256xf32, #tpu.memory_space<vmem>>, %arg9: memref<128x256xf32, #tpu.memory_space<vmem>>) attributes {dimension_semantics = [], scalar_prefetch = 0 : i64, scratch_operands = 1 : i64, tpu.core_type = #tpu.core_type<tc>} {
    %c0 = arith.constant 0 : index
    %c0_0 = arith.constant 0 : index
    %0 = vector.load %arg0[%c0, %c0_0] : memref<128x256xf32, #tpu.memory_space<vmem>>, vector<128x256xf32>
    %c0_1 = arith.constant 0 : index
    %c0_2 = arith.constant 0 : index
    %1 = vector.load %arg1[%c0_1, %c0_2] : memref<32x128xf32, #tpu.memory_space<vmem>>, vector<32x128xf32>
    %c0_3 = arith.constant 0 : index
    %c0_4 = arith.constant 0 : index
    %2 = vector.load %arg2[%c0_3, %c0_4] : memref<128x128xf32, #tpu.memory_space<vmem>>, vector<128x128xf32>
    %c0_5 = arith.constant 0 : index
    %c0_6 = arith.constant 0 : index
    %3 = vector.load %arg3[%c0_5, %c0_6] : memref<128x1xf32, #tpu.memory_space<vmem>>, vector<128x1xf32>
    %c0_7 = arith.constant 0 : index
    %c0_8 = arith.constant 0 : index
    %4 = vector.load %arg4[%c0_7, %c0_8] : memref<128x128xf32, #tpu.memory_space<vmem>>, vector<128x128xf32>
    %c0_9 = arith.constant 0 : index
    %c0_10 = arith.constant 0 : index
    %5 = vector.load %arg5[%c0_9, %c0_10] : memref<128x1xf32, #tpu.memory_space<vmem>>, vector<128x1xf32>
    %c0_11 = arith.constant 0 : index
    %c0_12 = arith.constant 0 : index
    %6 = vector.load %arg6[%c0_11, %c0_12] : memref<128x1xf32, #tpu.memory_space<vmem>>, vector<128x1xf32>
    %c0_13 = arith.constant 0 : index
    %c0_14 = arith.constant 0 : index
    %7 = vector.load %arg7[%c0_13, %c0_14] : memref<128x1xf32, #tpu.memory_space<vmem>>, vector<128x1xf32>
    %cst = arith.constant dense<0.000000e+00> : vector<32x256xf32>
    %8 = tpu.matmul %1, %0, %cst {dimension_numbers = #tpu.dot_dimension_numbers<[1], [0], [0], [1], [0, 0, 1, 1], [], []>} : vector<32x128xf32>, vector<128x256xf32>, vector<32x256xf32> -> vector<32x256xf32>
    %cst_15 = arith.constant dense<0.000000e+00> : vector<128x256xf32>
    %9 = tpu.matmul %2, %0, %cst_15 {dimension_numbers = #tpu.dot_dimension_numbers<[1], [0], [0], [1], [0, 0, 1, 1], [], []>} : vector<128x128xf32>, vector<128x256xf32>, vector<128x256xf32> -> vector<128x256xf32>
    %10 = vector.broadcast %3 : vector<128x1xf32> to vector<128x256xf32>
    %11 = arith.addf %9, %10 : vector<128x256xf32>
    %12 = vector.extract_strided_slice %8 {offsets = [0, 0], sizes = [32, 128], strides = [1, 1]} : vector<32x256xf32> to vector<32x128xf32>
    %13 = vector.extract_strided_slice %11 {offsets = [0, 0], sizes = [128, 128], strides = [1, 1]} : vector<128x256xf32> to vector<128x128xf32>
    %14 = vector.extract_strided_slice %0 {offsets = [0, 0], sizes = [128, 128], strides = [1, 1]} : vector<128x256xf32> to vector<128x128xf32>
    %cst_16 = arith.constant dense<0.000000e+00> : vector<128x128xf32>
    %15 = tpu.matmul %12, %12, %cst_16 {dimension_numbers = #tpu.dot_dimension_numbers<[0], [0], [1], [1], [0, 1, 1, 1], [], []>} : vector<32x128xf32>, vector<32x128xf32>, vector<128x128xf32> -> vector<128x128xf32>
    %cst_17 = arith.constant dense<0xFF800000> : vector<128xf32>
    %16 = vector.multi_reduction <maximumf>, %15, %cst_17 [1] : vector<128x128xf32> to vector<128xf32>
    %17 = vector.shape_cast %16 : vector<128xf32> to vector<128x1xf32>
    %18 = vector.broadcast %17 : vector<128x1xf32> to vector<128x128xf32>
    %19 = arith.subf %15, %18 : vector<128x128xf32>
    %20 = math.exp %19 : vector<128x128xf32>
    %cst_18 = arith.constant dense<0.000000e+00> : vector<128xf32>
    %21 = vector.multi_reduction <add>, %20, %cst_18 [1] : vector<128x128xf32> to vector<128xf32>
    %22 = vector.shape_cast %21 : vector<128xf32> to vector<128x1xf32>
    %23 = tpu.reciprocal %22 : vector<128x1xf32> -> vector<128x1xf32>
    %24 = vector.broadcast %23 : vector<128x1xf32> to vector<128x128xf32>
    %25 = arith.mulf %20, %24 : vector<128x128xf32>
    %cst_19 = arith.constant dense<0.000000e+00> : vector<128xf32>
    %26 = vector.multi_reduction <add>, %25, %cst_19 [0] : vector<128x128xf32> to vector<128xf32>
    %27 = vector.shape_cast %26 : vector<128xf32> to vector<1x128xf32>
    %cst_20 = arith.constant dense<0.000000e+00> : vector<128x128xf32>
    %28 = tpu.matmul %13, %25, %cst_20 {dimension_numbers = #tpu.dot_dimension_numbers<[1], [0], [0], [1], [0, 0, 1, 1], [], []>} : vector<128x128xf32>, vector<128x128xf32>, vector<128x128xf32> -> vector<128x128xf32>
    %cst_21 = arith.constant 9.99999971E-10 : f32
    %29 = vector.broadcast %cst_21 : f32 to vector<1x128xf32>
    %30 = arith.addf %29, %27 : vector<1x128xf32>
    %31 = tpu.reciprocal %30 : vector<1x128xf32> -> vector<1x128xf32>
    %32 = vector.broadcast %31 : vector<1x128xf32> to vector<128x128xf32>
    %33 = arith.mulf %28, %32 : vector<128x128xf32>
    %34 = arith.subf %14, %33 : vector<128x128xf32>
    %c0_22 = arith.constant 0 : index
    %c0_23 = arith.constant 0 : index
    %35 = vector.load %arg9[%c0_22, %c0_23] : memref<128x256xf32, #tpu.memory_space<vmem>>, vector<128x128xf32>
    tpu.vector_store %arg9[%c0_22, %c0_23], %34 {strides = array<i32>} : memref<128x256xf32, #tpu.memory_space<vmem>>, vector<128x128xf32>,
    %36 = vector.extract_strided_slice %8 {offsets = [0, 128], sizes = [32, 128], strides = [1, 1]} : vector<32x256xf32> to vector<32x128xf32>
    %37 = vector.extract_strided_slice %11 {offsets = [0, 128], sizes = [128, 128], strides = [1, 1]} : vector<128x256xf32> to vector<128x128xf32>
    %38 = vector.extract_strided_slice %0 {offsets = [0, 128], sizes = [128, 128], strides = [1, 1]} : vector<128x256xf32> to vector<128x128xf32>
    %cst_24 = arith.constant dense<0.000000e+00> : vector<128x128xf32>
    %39 = tpu.matmul %36, %36, %cst_24 {dimension_numbers = #tpu.dot_dimension_numbers<[0], [0], [1], [1], [0, 1, 1, 1], [], []>} : vector<32x128xf32>, vector<32x128xf32>, vector<128x128xf32> -> vector<128x128xf32>
    %cst_25 = arith.constant dense<0xFF800000> : vector<128xf32>
    %40 = vector.multi_reduction <maximumf>, %39, %cst_25 [1] : vector<128x128xf32> to vector<128xf32>
    %41 = vector.shape_cast %40 : vector<128xf32> to vector<128x1xf32>
    %42 = vector.broadcast %41 : vector<128x1xf32> to vector<128x128xf32>
    %43 = arith.subf %39, %42 : vector<128x128xf32>
    %44 = math.exp %43 : vector<128x128xf32>
    %cst_26 = arith.constant dense<0.000000e+00> : vector<128xf32>
    %45 = vector.multi_reduction <add>, %44, %cst_26 [1] : vector<128x128xf32> to vector<128xf32>
    %46 = vector.shape_cast %45 : vector<128xf32> to vector<128x1xf32>
    %47 = tpu.reciprocal %46 : vector<128x1xf32> -> vector<128x1xf32>
    %48 = vector.broadcast %47 : vector<128x1xf32> to vector<128x128xf32>
    %49 = arith.mulf %44, %48 : vector<128x128xf32>
    %cst_27 = arith.constant dense<0.000000e+00> : vector<128xf32>
    %50 = vector.multi_reduction <add>, %49, %cst_27 [0] : vector<128x128xf32> to vector<128xf32>
    %51 = vector.shape_cast %50 : vector<128xf32> to vector<1x128xf32>
    %cst_28 = arith.constant dense<0.000000e+00> : vector<128x128xf32>
    %52 = tpu.matmul %37, %49, %cst_28 {dimension_numbers = #tpu.dot_dimension_numbers<[1], [0], [0], [1], [0, 0, 1, 1], [], []>} : vector<128x128xf32>, vector<128x128xf32>, vector<128x128xf32> -> vector<128x128xf32>
    %cst_29 = arith.constant 9.99999971E-10 : f32
    %53 = vector.broadcast %cst_29 : f32 to vector<1x128xf32>
    %54 = arith.addf %53, %51 : vector<1x128xf32>
    %55 = tpu.reciprocal %54 : vector<1x128xf32> -> vector<1x128xf32>
    %56 = vector.broadcast %55 : vector<1x128xf32> to vector<128x128xf32>
    %57 = arith.mulf %52, %56 : vector<128x128xf32>
    %58 = arith.subf %38, %57 : vector<128x128xf32>
    %c0_30 = arith.constant 0 : index
    %c128 = arith.constant 128 : index
    %59 = vector.load %arg9[%c0_30, %c128] : memref<128x256xf32, #tpu.memory_space<vmem>>, vector<128x128xf32>
    tpu.vector_store %arg9[%c0_30, %c128], %58 {strides = array<i32>} : memref<128x256xf32, #tpu.memory_space<vmem>>, vector<128x128xf32>,
    %c0_31 = arith.constant 0 : index
    %c0_32 = arith.constant 0 : index
    %60 = vector.load %arg9[%c0_31, %c0_32] : memref<128x256xf32, #tpu.memory_space<vmem>>, vector<128x256xf32>
    %cst_33 = arith.constant dense<0.000000e+00> : vector<128x256xf32>
    %61 = tpu.matmul %4, %60, %cst_33 {dimension_numbers = #tpu.dot_dimension_numbers<[1], [0], [0], [1], [0, 0, 1, 1], [], []>} : vector<128x128xf32>, vector<128x256xf32>, vector<128x256xf32> -> vector<128x256xf32>
    %62 = vector.broadcast %5 : vector<128x1xf32> to vector<128x256xf32>
    %63 = arith.addf %61, %62 : vector<128x256xf32>
    %cst_34 = arith.constant dense<0.000000e+00> : vector<128xf32>
    %64 = vector.multi_reduction <add>, %63, %cst_34 [1] : vector<128x256xf32> to vector<128xf32>
    %65 = vector.shape_cast %64 : vector<128xf32> to vector<128x1xf32>
    %cst_35 = arith.constant 2.560000e+02 : f32
    %66 = vector.broadcast %cst_35 : f32 to vector<128x1xf32>
    %67 = arith.divf %65, %66 : vector<128x1xf32>
    %68 = arith.mulf %63, %63 : vector<128x256xf32>
    %cst_36 = arith.constant dense<0.000000e+00> : vector<128xf32>
    %69 = vector.multi_reduction <add>, %68, %cst_36 [1] : vector<128x256xf32> to vector<128xf32>
    %70 = vector.shape_cast %69 : vector<128xf32> to vector<128x1xf32>
    %cst_37 = arith.constant 2.560000e+02 : f32
    %71 = vector.broadcast %cst_37 : f32 to vector<128x1xf32>
    %72 = arith.divf %70, %71 : vector<128x1xf32>
    %73 = arith.mulf %67, %67 : vector<128x1xf32>
    %74 = arith.subf %72, %73 : vector<128x1xf32>
    %cst_38 = arith.constant 9.99999974E-6 : f32
    %75 = vector.broadcast %cst_38 : f32 to vector<128x1xf32>
    %76 = arith.addf %74, %75 : vector<128x1xf32>
    %77 = math.rsqrt %76 : vector<128x1xf32>
    %78 = vector.broadcast %67 : vector<128x1xf32> to vector<128x256xf32>
    %79 = arith.subf %63, %78 : vector<128x256xf32>
    %80 = vector.broadcast %77 : vector<128x1xf32> to vector<128x256xf32>
    %81 = arith.mulf %79, %80 : vector<128x256xf32>
    %82 = vector.broadcast %6 : vector<128x1xf32> to vector<128x256xf32>
    %83 = arith.mulf %81, %82 : vector<128x256xf32>
    %84 = vector.broadcast %7 : vector<128x1xf32> to vector<128x256xf32>
    %85 = arith.addf %83, %84 : vector<128x256xf32>
    %cst_39 = arith.constant 0.000000e+00 : f32
    %86 = vector.broadcast %cst_39 : f32 to vector<128x256xf32>
    %87 = arith.maximumf %85, %86 : vector<128x256xf32>
    %88 = arith.addf %0, %87 : vector<128x256xf32>
    %c0_40 = arith.constant 0 : index
    %c0_41 = arith.constant 0 : index
    %89 = vector.load %arg8[%c0_40, %c0_41] : memref<128x256xf32, #tpu.memory_space<vmem>>, vector<128x256xf32>
    tpu.vector_store %arg8[%c0_40, %c0_41], %88 {strides = array<i32>} : memref<128x256xf32, #tpu.memory_space<vmem>>, vector<128x256xf32>,
    return
  }
}

</mosaic_0001>

<llo_original>
// kernel: sa_layer.1
$region0: #{sa_layer.1}
  #allocation0 [shape = 'u32[]', space=smem, size = 0x4, offset = 0x4, fixed_abs, tag = 'smem constant byte address 0x4 - core index']
  #allocation1 [shape = 'u32[144,128]{1,0:T(1,128)}', space=vmem, size = 0x12000, scoped, tag = 'internal scratch']
  #allocation2 [shape = 'f32[128,256]{1,0:T(8,128)}', space=vmem, size = 0x20000, scoped, tag = 'scratch operand']
  %s0 = inlined_call_operand.vmem [shape: f32[128,256], index: 0, kind: input, shape index: {}]
  %s1 = inlined_call_operand.vmem [shape: f32[32,128], index: 1, kind: input, shape index: {}]
  %s2 = inlined_call_operand.vmem [shape: f32[128,128], index: 2, kind: input, shape index: {}]
  %s3 = inlined_call_operand.vmem [shape: f32[128,1], index: 3, kind: input, shape index: {}]
  %s4 = inlined_call_operand.vmem [shape: f32[128,128], index: 4, kind: input, shape index: {}]
  %s5 = inlined_call_operand.vmem [shape: f32[128,1], index: 5, kind: input, shape index: {}]
  %s6 = inlined_call_operand.vmem [shape: f32[128,1], index: 6, kind: input, shape index: {}]
  %s7 = inlined_call_operand.vmem [shape: f32[128,1], index: 7, kind: input, shape index: {}]
  %s8 = inlined_call_operand.vmem [shape: f32[128,256], index: 8, kind: output, shape index: {}]
  %s9 = sld [smem:[#allocation0]]
  $region42: #{sa_layer.1} parent=0
    _
  %s11 = ssub.s32 1, %s9
  %s12 = scalar_select 0, %s11, %s9
  // Predicated region
  $region2: #{sa_layer.1} parent=0 // pred_check
    _
  $region3: #{sa_layer.1} parent=0 // pred_check_branch
    %14 = sbr.rel (0) target = $region5
  $region4: #{sa_layer.1} parent=0 // pred_region
    _
  $region5: #{sa_layer.1} parent=0 // pred_fallthru
    _
  // Predicated region
  $region6: #{sa_layer.1} parent=0 // pred_check
    _
  $region7: #{sa_layer.1} parent=0 // pred_check_branch
    %16 = sbr.rel (0) target = $region9
  $region8: #{sa_layer.1} parent=0 // pred_region
    _
  $region9: #{sa_layer.1} parent=0 // pred_fallthru
    _
  // Predicated region
  $region10: #{sa_layer.1} parent=0 // pred_check
    _
  $region11: #{sa_layer.1} parent=0 // pred_check_branch
    %18 = sbr.rel (0) target = $region13
  $region12: #{sa_layer.1} parent=0 // pred_region
    _
  $region13: #{sa_layer.1} parent=0 // pred_fallthru
    _
  // Predicated region
  $region14: #{sa_layer.1} parent=0 // pred_check
    _
  $region15: #{sa_layer.1} parent=0 // pred_check_branch
    %20 = sbr.rel (0) target = $region17
  $region16: #{sa_layer.1} parent=0 // pred_region
    _
  $region17: #{sa_layer.1} parent=0 // pred_fallthru
    _
  // Predicated region
  $region18: #{sa_layer.1} parent=0 // pred_check
    _
  $region19: #{sa_layer.1} parent=0 // pred_check_branch
    %22 = sbr.rel (0) target = $region21
  $region20: #{sa_layer.1} parent=0 // pred_region
    _
  $region21: #{sa_layer.1} parent=0 // pred_fallthru
    _
  // Predicated region
  $region22: #{sa_layer.1} parent=0 // pred_check
    _
  $region23: #{sa_layer.1} parent=0 // pred_check_branch
    %24 = sbr.rel (0) target = $region25
  $region24: #{sa_layer.1} parent=0 // pred_region
    _
  $region25: #{sa_layer.1} parent=0 // pred_fallthru
    _
  // Predicated region
  $region26: #{sa_layer.1} parent=0 // pred_check
    _
  $region27: #{sa_layer.1} parent=0 // pred_check_branch
    %26 = sbr.rel (0) target = $region29
  $region28: #{sa_layer.1} parent=0 // pred_region
    _
  $region29: #{sa_layer.1} parent=0 // pred_fallthru
    _
  // Predicated region
  $region30: #{sa_layer.1} parent=0 // pred_check
    _
  $region31: #{sa_layer.1} parent=0 // pred_check_branch
    %28 = sbr.rel (0) target = $region33
  $region32: #{sa_layer.1} parent=0 // pred_region
    _
  $region33: #{sa_layer.1} parent=0 // pred_fallthru
    _
  %v29 = vld [vmem:[%s0] sm:$0xff]
  %v30 = vld [vmem:[%s0 + $0x8] sm:$0xff]
  %v31 = vld [vmem:[%s0 + $0x10] sm:$0xff]
  %v32 = vld [vmem:[%s0 + $0x18] sm:$0xff]
  %v33 = vld [vmem:[%s0 + $0x20] sm:$0xff]
  %v34 = vld [vmem:[%s0 + $0x28] sm:$0xff]
  %v35 = vld [vmem:[%s0 + $0x30] sm:$0xff]
  %v36 = vld [vmem:[%s0 + $0x38] sm:$0xff]
  %v37 = vld [vmem:[%s0 + $0x40] sm:$0xff]
  %v38 = vld [vmem:[%s0 + $0x48] sm:$0xff]
  %v39 = vld [vmem:[%s0 + $0x50] sm:$0xff]
  %v40 = vld [vmem:[%s0 + $0x58] sm:$0xff]
  %v41 = vld [vmem:[%s0 + $0x60] sm:$0xff]
  %v42 = vld [vmem:[%s0 + $0x68] sm:$0xff]
  %v43 = vld [vmem:[%s0 + $0x70] sm:$0xff]
  %v44 = vld [vmem:[%s0 + $0x78] sm:$0xff]
  %v45 = vld [vmem:[%s0 + $0x80] sm:$0xff]
  %v46 = vld [vmem:[%s0 + $0x88] sm:$0xff]
  %v47 = vld [vmem:[%s0 + $0x90] sm:$0xff]
  %v48 = vld [vmem:[%s0 + $0x98] sm:$0xff]
  %v49 = vld [vmem:[%s0 + $0xa0] sm:$0xff]
  %v50 = vld [vmem:[%s0 + $0xa8] sm:$0xff]
  %v51 = vld [vmem:[%s0 + $0xb0] sm:$0xff]
  %v52 = vld [vmem:[%s0 + $0xb8] sm:$0xff]
  %v53 = vld [vmem:[%s0 + $0xc0] sm:$0xff]
  %v54 = vld [vmem:[%s0 + $0xc8] sm:$0xff]
  %v55 = vld [vmem:[%s0 + $0xd0] sm:$0xff]
  %v56 = vld [vmem:[%s0 + $0xd8] sm:$0xff]
  %v57 = vld [vmem:[%s0 + $0xe0] sm:$0xff]
  %v58 = vld [vmem:[%s0 + $0xe8] sm:$0xff]
  %v59 = vld [vmem:[%s0 + $0xf0] sm:$0xff]
  %v60 = vld [vmem:[%s0 + $0xf8] sm:$0xff]
  %v61 = vld [vmem:[%s1] sm:$0xff]
  %v62 = vld [vmem:[%s1 + $0x8] sm:$0xff]
  %v63 = vld [vmem:[%s1 + $0x10] sm:$0xff]
  %v64 = vld [vmem:[%s1 + $0x18] sm:$0xff]
  %v65 = vld [vmem:[%s2] sm:$0xff]
  %v66 = vld [vmem:[%s2 + $0x8] sm:$0xff]
  %v67 = vld [vmem:[%s2 + $0x10] sm:$0xff]
  %v68 = vld [vmem:[%s2 + $0x18] sm:$0xff]
  %v69 = vld [vmem:[%s2 + $0x20] sm:$0xff]
  %v70 = vld [vmem:[%s2 + $0x28] sm:$0xff]
  %v71 = vld [vmem:[%s2 + $0x30] sm:$0xff]
  %v72 = vld [vmem:[%s2 + $0x38] sm:$0xff]
  %v73 = vld [vmem:[%s2 + $0x40] sm:$0xff]
  %v74 = vld [vmem:[%s2 + $0x48] sm:$0xff]
  %v75 = vld [vmem:[%s2 + $0x50] sm:$0xff]
  %v76 = vld [vmem:[%s2 + $0x58] sm:$0xff]
  %v77 = vld [vmem:[%s2 + $0x60] sm:$0xff]
  %v78 = vld [vmem:[%s2 + $0x68] sm:$0xff]
  %v79 = vld [vmem:[%s2 + $0x70] sm:$0xff]
  %v80 = vld [vmem:[%s2 + $0x78] sm:$0xff]
  %v81 = vld [vmem:[%s3] sm:$0xff]
  %v82 = vld [vmem:[%s3 + $0x8] sm:$0xff]
  %v83 = vld [vmem:[%s3 + $0x10] sm:$0xff]
  %v84 = vld [vmem:[%s3 + $0x18] sm:$0xff]
  %v85 = vld [vmem:[%s3 + $0x20] sm:$0xff]
  %v86 = vld [vmem:[%s3 + $0x28] sm:$0xff]
  %v87 = vld [vmem:[%s3 + $0x30] sm:$0xff]
  %v88 = vld [vmem:[%s3 + $0x38] sm:$0xff]
  %v89 = vld [vmem:[%s3 + $0x40] sm:$0xff]
  %v90 = vld [vmem:[%s3 + $0x48] sm:$0xff]
  %v91 = vld [vmem:[%s3 + $0x50] sm:$0xff]
  %v92 = vld [vmem:[%s3 + $0x58] sm:$0xff]
  %v93 = vld [vmem:[%s3 + $0x60] sm:$0xff]
  %v94 = vld [vmem:[%s3 + $0x68] sm:$0xff]
  %v95 = vld [vmem:[%s3 + $0x70] sm:$0xff]
  %v96 = vld [vmem:[%s3 + $0x78] sm:$0xff]
  %v97 = vld [vmem:[%s4] sm:$0xff]
  %v98 = vld [vmem:[%s4 + $0x8] sm:$0xff]
  %v99 = vld [vmem:[%s4 + $0x10] sm:$0xff]
  %v100 = vld [vmem:[%s4 + $0x18] sm:$0xff]
  %v101 = vld [vmem:[%s4 + $0x20] sm:$0xff]
  %v102 = vld [vmem:[%s4 + $0x28] sm:$0xff]
  %v103 = vld [vmem:[%s4 + $0x30] sm:$0xff]
  %v104 = vld [vmem:[%s4 + $0x38] sm:$0xff]
  %v105 = vld [vmem:[%s4 + $0x40] sm:$0xff]
  %v106 = vld [vmem:[%s4 + $0x48] sm:$0xff]
  %v107 = vld [vmem:[%s4 + $0x50] sm:$0xff]
  %v108 = vld [vmem:[%s4 + $0x58] sm:$0xff]
  %v109 = vld [vmem:[%s4 + $0x60] sm:$0xff]
  %v110 = vld [vmem:[%s4 + $0x68] sm:$0xff]
  %v111 = vld [vmem:[%s4 + $0x70] sm:$0xff]
  %v112 = vld [vmem:[%s4 + $0x78] sm:$0xff]
  %v113 = vld [vmem:[%s5] sm:$0xff]
  %v114 = vld [vmem:[%s5 + $0x8] sm:$0xff]
  %v115 = vld [vmem:[%s5 + $0x10] sm:$0xff]
  %v116 = vld [vmem:[%s5 + $0x18] sm:$0xff]
  %v117 = vld [vmem:[%s5 + $0x20] sm:$0xff]
  %v118 = vld [vmem:[%s5 + $0x28] sm:$0xff]
  %v119 = vld [vmem:[%s5 + $0x30] sm:$0xff]
  %v120 = vld [vmem:[%s5 + $0x38] sm:$0xff]
  %v121 = vld [vmem:[%s5 + $0x40] sm:$0xff]
  %v122 = vld [vmem:[%s5 + $0x48] sm:$0xff]
  %v123 = vld [vmem:[%s5 + $0x50] sm:$0xff]
  %v124 = vld [vmem:[%s5 + $0x58] sm:$0xff]
  %v125 = vld [vmem:[%s5 + $0x60] sm:$0xff]
  %v126 = vld [vmem:[%s5 + $0x68] sm:$0xff]
  %v127 = vld [vmem:[%s5 + $0x70] sm:$0xff]
  %v128 = vld [vmem:[%s5 + $0x78] sm:$0xff]
  %v129 = vld [vmem:[%s6] sm:$0xff]
  %v130 = vld [vmem:[%s6 + $0x8] sm:$0xff]
  %v131 = vld [vmem:[%s6 + $0x10] sm:$0xff]
  %v132 = vld [vmem:[%s6 + $0x18] sm:$0xff]
  %v133 = vld [vmem:[%s6 + $0x20] sm:$0xff]
  %v134 = vld [vmem:[%s6 + $0x28] sm:$0xff]
  %v135 = vld [vmem:[%s6 + $0x30] sm:$0xff]
  %v136 = vld [vmem:[%s6 + $0x38] sm:$0xff]
  %v137 = vld [vmem:[%s6 + $0x40] sm:$0xff]
  %v138 = vld [vmem:[%s6 + $0x48] sm:$0xff]
  %v139 = vld [vmem:[%s6 + $0x50] sm:$0xff]
  %v140 = vld [vmem:[%s6 + $0x58] sm:$0xff]
  %v141 = vld [vmem:[%s6 + $0x60] sm:$0xff]
  %v142 = vld [vmem:[%s6 + $0x68] sm:$0xff]
  %v143 = vld [vmem:[%s6 + $0x70] sm:$0xff]
  %v144 = vld [vmem:[%s6 + $0x78] sm:$0xff]
  %v145 = vld [vmem:[%s7] sm:$0xff]
  %v146 = vld [vmem:[%s7 + $0x8] sm:$0xff]
  %v147 = vld [vmem:[%s7 + $0x10] sm:$0xff]
  %v148 = vld [vmem:[%s7 + $0x18] sm:$0xff]
  %v149 = vld [vmem:[%s7 + $0x20] sm:$0xff]
  %v150 = vld [vmem:[%s7 + $0x28] sm:$0xff]
  %v151 = vld [vmem:[%s7 + $0x30] sm:$0xff]
  %v152 = vld [vmem:[%s7 + $0x38] sm:$0xff]
  %v153 = vld [vmem:[%s7 + $0x40] sm:$0xff]
  %v154 = vld [vmem:[%s7 + $0x48] sm:$0xff]
  %v155 = vld [vmem:[%s7 + $0x50] sm:$0xff]
  %v156 = vld [vmem:[%s7 + $0x58] sm:$0xff]
  %v157 = vld [vmem:[%s7 + $0x60] sm:$0xff]
  %v158 = vld [vmem:[%s7 + $0x68] sm:$0xff]
  %v159 = vld [vmem:[%s7 + $0x70] sm:$0xff]
  %v160 = vld [vmem:[%s7 + $0x78] sm:$0xff]
  %161 = vmatprep.subr.mxu0 %v30
  %162 = vmatpush1.msra.mxu0 %v29
  %163 = vmatprep.subr.mxu0 %v32
  %164 = vmatpush1.msra.mxu0 %v31
  %165 = vmatprep.subr.mxu0 %v34
  %166 = vmatpush1.msra.mxu0 %v33
  %167 = vmatprep.subr.mxu0 %v36
  %168 = vmatpush1.msra.mxu0 %v35
  %169 = vmatprep.subr.mxu0 %v38
  %170 = vmatpush1.msra.mxu0 %v37
  %171 = vmatprep.subr.mxu0 %v40
  %172 = vmatpush1.msra.mxu0 %v39
  %173 = vmatprep.subr.mxu0 %v42
  %174 = vmatpush1.msra.mxu0 %v41
  %175 = vmatprep.subr.mxu0 %v44
  %176 = vmatpush1.msra.mxu0 %v43
  %177 = vmatprep.subr.mxu0 %v46
  %178 = vmatpush1.msra.mxu0 %v45
  %179 = vmatprep.subr.mxu0 %v48
  %180 = vmatpush1.msra.mxu0 %v47
  %181 = vmatprep.subr.mxu0 %v50
  %182 = vmatpush1.msra.mxu0 %v49
  %183 = vmatprep.subr.mxu0 %v52
  %184 = vmatpush1.msra.mxu0 %v51
  %185 = vmatprep.subr.mxu0 %v54
  %186 = vmatpush1.msra.mxu0 %v53
  %187 = vmatprep.subr.mxu0 %v56
  %188 = vmatpush1.msra.mxu0 %v55
  %189 = vmatprep.subr.mxu0 %v58
  %190 = vmatpush1.msra.mxu0 %v57
  %191 = vmatprep.subr.mxu0 %v60
  %192 = vmatpush1.msra.mxu0 %v59
  %193 = vmatprep.subr.mxu0 0.0
  %194 = vmatpush1.msra.mxu0 0.0
  %195 = vmatprep.subr.mxu0 0.0
  %196 = vmatpush1.msra.mxu0 0.0
  %197 = vmatprep.subr.mxu0 0.0
  %198 = vmatpush1.msra.mxu0 0.0
  %199 = vmatprep.subr.mxu0 0.0
  %200 = vmatpush1.msra.mxu0 0.0
  %201 = vmatprep.subr.mxu0 0.0
  %202 = vmatpush1.msra.mxu0 0.0
  %203 = vmatprep.subr.mxu0 0.0
  %204 = vmatpush1.msra.mxu0 0.0
  %205 = vmatprep.subr.mxu0 0.0
  %206 = vmatpush1.msra.mxu0 0.0
  %207 = vmatprep.subr.mxu0 0.0
  %208 = vmatpush1.msra.mxu0 0.0
  %209 = vmatprep.subr.mxu0 0.0
  %210 = vmatpush1.msra.mxu0 0.0
  %211 = vmatprep.subr.mxu0 0.0
  %212 = vmatpush1.msra.mxu0 0.0
  %213 = vmatprep.subr.mxu0 0.0
  %214 = vmatpush1.msra.mxu0 0.0
  %215 = vmatprep.subr.mxu0 0.0
  %216 = vmatpush1.msra.mxu0 0.0
  %217 = vmatprep.subr.mxu0 0.0
  %218 = vmatpush1.msra.mxu0 0.0
  %219 = vmatprep.subr.mxu0 0.0
  %220 = vmatpush1.msra.mxu0 0.0
  %221 = vmatprep.subr.mxu0 0.0
  %222 = vmatpush1.msra.mxu0 0.0
  %223 = vmatprep.subr.mxu0 0.0
  %224 = vmatpush1.msra.mxu0 0.0
  %225 = vmatprep.mubr.f32.mxu0 0.0
  %226 = vmatmul.mubr.f32.gmra.mrb[0].mxu0 %v61
  %v227 = vpop.f32.mrb[0].mxu0
  %v228 = vadd.f32 0.0, %v227
  %v229 = vpop.f32.mrb[0].mxu0
  %v230 = vadd.f32 0.0, %v229
  %231 = vmatprep.mubr.f32.mxu0 0.0
  %232 = vmatmul.mubr.f32.gmra.mrb[0].mxu0 %v62
  %v233 = vpop.f32.mrb[0].mxu0
  %v234 = vadd.f32 0.0, %v233
  %v235 = vpop.f32.mrb[0].mxu0
  %v236 = vadd.f32 0.0, %v235
  %237 = vmatprep.mubr.f32.mxu0 0.0
  %238 = vmatmul.mubr.f32.gmra.mrb[0].mxu0 %v63
  %v239 = vpop.f32.mrb[0].mxu0
  %v240 = vadd.f32 0.0, %v239
  %v241 = vpop.f32.mrb[0].mxu0
  %v242 = vadd.f32 0.0, %v241
  %243 = vmatprep.mubr.f32.mxu0 0.0
  %244 = vmatmul.mubr.f32.gmra.mrb[0].mxu0 %v64
  %v245 = vpop.f32.mrb[0].mxu0
  %v246 = vadd.f32 0.0, %v245
  %v247 = vpop.f32.mrb[0].mxu0
  %v248 = vadd.f32 0.0, %v247
  %249 = vdwg.mxu0
  %251 = vset.pattern.permute.xlu0 0
  %252 = vperm.xlu0 %251, %v81
  %v253 = vpop.permute.xlu0 %252
  %256 = vset.pattern.permute.xlu0 0
  %257 = vperm.xlu0 %256, %v82
  %v258 = vpop.permute.xlu0 %257
  %261 = vset.pattern.permute.xlu0 0
  %262 = vperm.xlu0 %261, %v83
  %v263 = vpop.permute.xlu0 %262
  %266 = vset.pattern.permute.xlu0 0
  %267 = vperm.xlu0 %266, %v84
  %v268 = vpop.permute.xlu0 %267
  %271 = vset.pattern.permute.xlu0 0
  %272 = vperm.xlu0 %271, %v85
  %v273 = vpop.permute.xlu0 %272
  %276 = vset.pattern.permute.xlu0 0
  %277 = vperm.xlu0 %276, %v86
  %v278 = vpop.permute.xlu0 %277
  %281 = vset.pattern.permute.xlu0 0
  %282 = vperm.xlu0 %281, %v87
  %v283 = vpop.permute.xlu0 %282
  %286 = vset.pattern.permute.xlu0 0
  %287 = vperm.xlu0 %286, %v88
  %v288 = vpop.permute.xlu0 %287
  %291 = vset.pattern.permute.xlu0 0
  %292 = vperm.xlu0 %291, %v89
  %v293 = vpop.permute.xlu0 %292
  %296 = vset.pattern.permute.xlu0 0
  %297 = vperm.xlu0 %296, %v90
  %v298 = vpop.permute.xlu0 %297
  %301 = vset.pattern.permute.xlu0 0
  %302 = vperm.xlu0 %301, %v91
  %v303 = vpop.permute.xlu0 %302
  %306 = vset.pattern.permute.xlu0 0
  %307 = vperm.xlu0 %306, %v92
  %v308 = vpop.permute.xlu0 %307
  %311 = vset.pattern.permute.xlu0 0
  %312 = vperm.xlu0 %311, %v93
  %v313 = vpop.permute.xlu0 %312
  %316 = vset.pattern.permute.xlu0 0
  %317 = vperm.xlu0 %316, %v94
  %v318 = vpop.permute.xlu0 %317
  %321 = vset.pattern.permute.xlu0 0
  %322 = vperm.xlu0 %321, %v95
  %v323 = vpop.permute.xlu0 %322
  %326 = vset.pattern.permute.xlu0 0
  %327 = vperm.xlu0 %326, %v96
  %v328 = vpop.permute.xlu0 %327
  %330 = vmatprep.subr.mxu0 %v30
  %331 = vmatpush1.msra.mxu0 %v29
  %332 = vmatprep.subr.mxu0 %v32
  %333 = vmatpush1.msra.mxu0 %v31
  %334 = vmatprep.subr.mxu0 %v34
  %335 = vmatpush1.msra.mxu0 %v33
  %336 = vmatprep.subr.mxu0 %v36
  %337 = vmatpush1.msra.mxu0 %v35
  %338 = vmatprep.subr.mxu0 %v38
  %339 = vmatpush1.msra.mxu0 %v37
  %340 = vmatprep.subr.mxu0 %v40
  %341 = vmatpush1.msra.mxu0 %v39
  %342 = vmatprep.subr.mxu0 %v42
  %343 = vmatpush1.msra.mxu0 %v41
  %344 = vmatprep.subr.mxu0 %v44
  %345 = vmatpush1.msra.mxu0 %v43
  %346 = vmatprep.subr.mxu0 %v46
  %347 = vmatpush1.msra.mxu0 %v45
  %348 = vmatprep.subr.mxu0 %v48
  %349 = vmatpush1.msra.mxu0 %v47
  %350 = vmatprep.subr.mxu0 %v50
  %351 = vmatpush1.msra.mxu0 %v49
  %352 = vmatprep.subr.mxu0 %v52
  %353 = vmatpush1.msra.mxu0 %v51
  %354 = vmatprep.subr.mxu0 %v54
  %355 = vmatpush1.msra.mxu0 %v53
  %356 = vmatprep.subr.mxu0 %v56
  %357 = vmatpush1.msra.mxu0 %v55
  %358 = vmatprep.subr.mxu0 %v58
  %359 = vmatpush1.msra.mxu0 %v57
  %360 = vmatprep.subr.mxu0 %v60
  %361 = vmatpush1.msra.mxu0 %v59
  %362 = vmatprep.subr.mxu0 0.0
  %363 = vmatpush1.msra.mxu0 0.0
  %364 = vmatprep.subr.mxu0 0.0
  %365 = vmatpush1.msra.mxu0 0.0
  %366 = vmatprep.subr.mxu0 0.0
  %367 = vmatpush1.msra.mxu0 0.0
  %368 = vmatprep.subr.mxu0 0.0
  %369 = vmatpush1.msra.mxu0 0.0
  %370 = vmatprep.subr.mxu0 0.0
  %371 = vmatpush1.msra.mxu0 0.0
  %372 = vmatprep.subr.mxu0 0.0
  %373 = vmatpush1.msra.mxu0 0.0
  %374 = vmatprep.subr.mxu0 0.0
  %375 = vmatpush1.msra.mxu0 0.0
  %376 = vmatprep.subr.mxu0 0.0
  %377 = vmatpush1.msra.mxu0 0.0
  %378 = vmatprep.subr.mxu0 0.0
  %379 = vmatpush1.msra.mxu0 0.0
  %380 = vmatprep.subr.mxu0 0.0
  %381 = vmatpush1.msra.mxu0 0.0
  %382 = vmatprep.subr.mxu0 0.0
  %383 = vmatpush1.msra.mxu0 0.0
  %384 = vmatprep.subr.mxu0 0.0
  %385 = vmatpush1.msra.mxu0 0.0
  %386 = vmatprep.subr.mxu0 0.0
  %387 = vmatpush1.msra.mxu0 0.0
  %388 = vmatprep.subr.mxu0 0.0
  %389 = vmatpush1.msra.mxu0 0.0
  %390 = vmatprep.subr.mxu0 0.0
  %391 = vmatpush1.msra.mxu0 0.0
  %392 = vmatprep.subr.mxu0 0.0
  %393 = vmatpush1.msra.mxu0 0.0
  %394 = vmatprep.mubr.f32.mxu0 0.0
  %395 = vmatmul.mubr.f32.gmra.mrb[0].mxu0 %v65
  %v396 = vpop.f32.mrb[0].mxu0
  %v397 = vadd.f32 %v253, %v396
  %v398 = vpop.f32.mrb[0].mxu0
  %v399 = vadd.f32 %v253, %v398
  %400 = vmatprep.mubr.f32.mxu0 0.0
  %401 = vmatmul.mubr.f32.gmra.mrb[0].mxu0 %v66
  %v402 = vpop.f32.mrb[0].mxu0
  %v403 = vadd.f32 %v258, %v402
  %v404 = vpop.f32.mrb[0].mxu0
  %v405 = vadd.f32 %v258, %v404
  %406 = vmatprep.mubr.f32.mxu0 0.0
  %407 = vmatmul.mubr.f32.gmra.mrb[0].mxu0 %v67
  %v408 = vpop.f32.mrb[0].mxu0
  %v409 = vadd.f32 %v263, %v408
  %v410 = vpop.f32.mrb[0].mxu0
  %v411 = vadd.f32 %v263, %v410
  %412 = vmatprep.mubr.f32.mxu0 0.0
  %413 = vmatmul.mubr.f32.gmra.mrb[0].mxu0 %v68
  %v414 = vpop.f32.mrb[0].mxu0
  %v415 = vadd.f32 %v268, %v414
  %v416 = vpop.f32.mrb[0].mxu0
  %v417 = vadd.f32 %v268, %v416
  %418 = vmatprep.mubr.f32.mxu0 0.0
  %419 = vmatmul.mubr.f32.gmra.mrb[0].mxu0 %v69
  %v420 = vpop.f32.mrb[0].mxu0
  %v421 = vadd.f32 %v273, %v420
  %v422 = vpop.f32.mrb[0].mxu0
  %v423 = vadd.f32 %v273, %v422
  %424 = vmatprep.mubr.f32.mxu0 0.0
  %425 = vmatmul.mubr.f32.gmra.mrb[0].mxu0 %v70
  %v426 = vpop.f32.mrb[0].mxu0
  %v427 = vadd.f32 %v278, %v426
  %v428 = vpop.f32.mrb[0].mxu0
  %v429 = vadd.f32 %v278, %v428
  %430 = vmatprep.mubr.f32.mxu0 0.0
  %431 = vmatmul.mubr.f32.gmra.mrb[0].mxu0 %v71
  %v432 = vpop.f32.mrb[0].mxu0
  %v433 = vadd.f32 %v283, %v432
  %v434 = vpop.f32.mrb[0].mxu0
  %v435 = vadd.f32 %v283, %v434
  %436 = vmatprep.mubr.f32.mxu0 0.0
  %437 = vmatmul.mubr.f32.gmra.mrb[0].mxu0 %v72
  %v438 = vpop.f32.mrb[0].mxu0
  %v439 = vadd.f32 %v288, %v438
  %v440 = vpop.f32.mrb[0].mxu0
  %v441 = vadd.f32 %v288, %v440
  %442 = vmatprep.mubr.f32.mxu0 0.0
  %443 = vmatmul.mubr.f32.gmra.mrb[0].mxu0 %v73
  %v444 = vpop.f32.mrb[0].mxu0
  %v445 = vadd.f32 %v293, %v444
  %v446 = vpop.f32.mrb[0].mxu0
  %v447 = vadd.f32 %v293, %v446
  %448 = vmatprep.mubr.f32.mxu0 0.0
  %449 = vmatmul.mubr.f32.gmra.mrb[0].mxu0 %v74
  %v450 = vpop.f32.mrb[0].mxu0
  %v451 = vadd.f32 %v298, %v450
  %v452 = vpop.f32.mrb[0].mxu0
  %v453 = vadd.f32 %v298, %v452
  %454 = vmatprep.mubr.f32.mxu0 0.0
  %455 = vmatmul.mubr.f32.gmra.mrb[0].mxu0 %v75
  %v456 = vpop.f32.mrb[0].mxu0
  %v457 = vadd.f32 %v303, %v456
  %v458 = vpop.f32.mrb[0].mxu0
  %v459 = vadd.f32 %v303, %v458
  %460 = vmatprep.mubr.f32.mxu0 0.0
  %461 = vmatmul.mubr.f32.gmra.mrb[0].mxu0 %v76
  %v462 = vpop.f32.mrb[0].mxu0
  %v463 = vadd.f32 %v308, %v462
  %v464 = vpop.f32.mrb[0].mxu0
  %v465 = vadd.f32 %v308, %v464
  %466 = vmatprep.mubr.f32.mxu0 0.0
  %467 = vmatmul.mubr.f32.gmra.mrb[0].mxu0 %v77
  %v468 = vpop.f32.mrb[0].mxu0
  %v469 = vadd.f32 %v313, %v468
  %v470 = vpop.f32.mrb[0].mxu0
  %v471 = vadd.f32 %v313, %v470
  %472 = vmatprep.mubr.f32.mxu0 0.0
  %473 = vmatmul.mubr.f32.gmra.mrb[0].mxu0 %v78
  %v474 = vpop.f32.mrb[0].mxu0
  %v475 = vadd.f32 %v318, %v474
  %v476 = vpop.f32.mrb[0].mxu0
  %v477 = vadd.f32 %v318, %v476
  %478 = vmatprep.mubr.f32.mxu0 0.0
  %479 = vmatmul.mubr.f32.gmra.mrb[0].mxu0 %v79
  %v480 = vpop.f32.mrb[0].mxu0
  %v481 = vadd.f32 %v323, %v480
  %v482 = vpop.f32.mrb[0].mxu0
  %v483 = vadd.f32 %v323, %v482
  %484 = vmatprep.mubr.f32.mxu0 0.0
  %485 = vmatmul.mubr.f32.gmra.mrb[0].mxu0 %v80
  %v486 = vpop.f32.mrb[0].mxu0
  %v487 = vadd.f32 %v328, %v486
  %v488 = vpop.f32.mrb[0].mxu0
  %v489 = vadd.f32 %v328, %v488
  %490 = vdwg.mxu0
  %491 = vxpose.xlu0.b32.start [1/16] %v228, 128
  %492 = vxpose.xlu0.b32.cont [2/16] %v234, 128
  %493 = vxpose.xlu0.b32.cont [3/16] %v240, 128
  %494 = vxpose.xlu0.b32.cont [4/16] %v246, 128
  %495 = vxpose.xlu0.b32.cont [5/16] 0.0, 128
  %496 = vxpose.xlu0.b32.cont [6/16] 0.0, 128
  %497 = vxpose.xlu0.b32.cont [7/16] 0.0, 128
  %498 = vxpose.xlu0.b32.cont [8/16] 0.0, 128
  %499 = vxpose.xlu0.b32.cont [9/16] 0.0, 128
  %500 = vxpose.xlu0.b32.cont [10/16] 0.0, 128
  %501 = vxpose.xlu0.b32.cont [11/16] 0.0, 128
  %502 = vxpose.xlu0.b32.cont [12/16] 0.0, 128
  %503 = vxpose.xlu0.b32.cont [13/16] 0.0, 128
  %504 = vxpose.xlu0.b32.cont [14/16] 0.0, 128
  %505 = vxpose.xlu0.b32.cont [15/16] 0.0, 128
  %506 = vxpose.xlu0.b32.end [16/16] 0.0, 128
  %v507 = vpop.trf.xlu0
  %v508 = vpop.trf.xlu0
  %v509 = vpop.trf.xlu0
  %v510 = vpop.trf.xlu0
  %v511 = vpop.trf.xlu0
  %v512 = vpop.trf.xlu0
  %v513 = vpop.trf.xlu0
  %v514 = vpop.trf.xlu0
  %v515 = vpop.trf.xlu0
  %v516 = vpop.trf.xlu0
  %v517 = vpop.trf.xlu0
  %v518 = vpop.trf.xlu0
  %v519 = vpop.trf.xlu0
  %v520 = vpop.trf.xlu0
  %v521 = vpop.trf.xlu0
  %v522 = vpop.trf.xlu0
  %vm523 = vcmask 261120
  %v525 = vsel %vm523, %v507, 0
  %v528 = vsel %vm523, %v508, 0
  %v531 = vsel %vm523, %v509, 0
  %v534 = vsel %vm523, %v510, 0
  %v537 = vsel %vm523, %v511, 0
  %v540 = vsel %vm523, %v512, 0
  %v543 = vsel %vm523, %v513, 0
  %v546 = vsel %vm523, %v514, 0
  %v549 = vsel %vm523, %v515, 0
  %v552 = vsel %vm523, %v516, 0
  %v555 = vsel %vm523, %v517, 0
  %v558 = vsel %vm523, %v518, 0
  %v561 = vsel %vm523, %v519, 0
  %v564 = vsel %vm523, %v520, 0
  %v567 = vsel %vm523, %v521, 0
  %v570 = vsel %vm523, %v522, 0
  %572 = vmatprep.subr.mxu0 0.0
  %573 = vmatpush1.msra.mxu0 %v228
  %574 = vmatprep.subr.mxu0 0.0
  %575 = vmatpush1.msra.mxu0 %v234
  %576 = vmatprep.subr.mxu0 0.0
  %577 = vmatpush1.msra.mxu0 %v240
  %578 = vmatprep.subr.mxu0 0.0
  %579 = vmatpush1.msra.mxu0 %v246
  %580 = vmatprep.subr.mxu0 0.0
  %581 = vmatpush1.msra.mxu0 0.0
  %582 = vmatprep.subr.mxu0 0.0
  %583 = vmatpush1.msra.mxu0 0.0
  %584 = vmatprep.subr.mxu0 0.0
  %585 = vmatpush1.msra.mxu0 0.0
  %586 = vmatprep.subr.mxu0 0.0
  %587 = vmatpush1.msra.mxu0 0.0
  %588 = vmatprep.subr.mxu0 0.0
  %589 = vmatpush1.msra.mxu0 0.0
  %590 = vmatprep.subr.mxu0 0.0
  %591 = vmatpush1.msra.mxu0 0.0
  %592 = vmatprep.subr.mxu0 0.0
  %593 = vmatpush1.msra.mxu0 0.0
  %594 = vmatprep.subr.mxu0 0.0
  %595 = vmatpush1.msra.mxu0 0.0
  %596 = vmatprep.subr.mxu0 0.0
  %597 = vmatpush1.msra.mxu0 0.0
  %598 = vmatprep.subr.mxu0 0.0
  %599 = vmatpush1.msra.mxu0 0.0
  %600 = vmatprep.subr.mxu0 0.0
  %601 = vmatpush1.msra.mxu0 0.0
  %602 = vmatprep.subr.mxu0 0.0
  %603 = vmatpush1.msra.mxu0 0.0
  %604 = vmatprep.subr.mxu0 0.0
  %605 = vmatpush1.msra.mxu0 0.0
  %606 = vmatprep.subr.mxu0 0.0
  %607 = vmatpush1.msra.mxu0 0.0
  %608 = vmatprep.subr.mxu0 0.0
  %609 = vmatpush1.msra.mxu0 0.0
  %610 = vmatprep.subr.mxu0 0.0
  %611 = vmatpush1.msra.mxu0 0.0
  %612 = vmatprep.subr.mxu0 0.0
  %613 = vmatpush1.msra.mxu0 0.0
  %614 = vmatprep.subr.mxu0 0.0
  %615 = vmatpush1.msra.mxu0 0.0
  %616 = vmatprep.subr.mxu0 0.0
  %617 = vmatpush1.msra.mxu0 0.0
  %618 = vmatprep.subr.mxu0 0.0
  %619 = vmatpush1.msra.mxu0 0.0
  %620 = vmatprep.subr.mxu0 0.0
  %621 = vmatpush1.msra.mxu0 0.0
  %622 = vmatprep.subr.mxu0 0.0
  %623 = vmatpush1.msra.mxu0 0.0
  %624 = vmatprep.subr.mxu0 0.0
  %625 = vmatpush1.msra.mxu0 0.0
  %626 = vmatprep.subr.mxu0 0.0
  %627 = vmatpush1.msra.mxu0 0.0
  %628 = vmatprep.subr.mxu0 0.0
  %629 = vmatpush1.msra.mxu0 0.0
  %630 = vmatprep.subr.mxu0 0.0
  %631 = vmatpush1.msra.mxu0 0.0
  %632 = vmatprep.subr.mxu0 0.0
  %633 = vmatpush1.msra.mxu0 0.0
  %634 = vmatprep.subr.mxu0 0.0
  %635 = vmatpush1.msra.mxu0 0.0
  %636 = vmatprep.mubr.f32.mxu0 0.0
  %637 = vmatmul.mubr.f32.gmra.mrb[0].mxu0 %v525
  %v638 = vpop.f32.mrb[0].mxu0
  %v639 = vadd.f32 0.0, %v638
  %v640 = vpop.f32.mrb[0].mxu0
  %641 = vmatprep.mubr.f32.mxu0 0.0
  %642 = vmatmul.mubr.f32.gmra.mrb[0].mxu0 %v528
  %v643 = vpop.f32.mrb[0].mxu0
  %v644 = vadd.f32 0.0, %v643
  %v645 = vpop.f32.mrb[0].mxu0
  %646 = vmatprep.mubr.f32.mxu0 0.0
  %647 = vmatmul.mubr.f32.gmra.mrb[0].mxu0 %v531
  %v648 = vpop.f32.mrb[0].mxu0
  %v649 = vadd.f32 0.0, %v648
  %v650 = vpop.f32.mrb[0].mxu0
  %651 = vmatprep.mubr.f32.mxu0 0.0
  %652 = vmatmul.mubr.f32.gmra.mrb[0].mxu0 %v534
  %v653 = vpop.f32.mrb[0].mxu0
  %v654 = vadd.f32 0.0, %v653
  %v655 = vpop.f32.mrb[0].mxu0
  %656 = vmatprep.mubr.f32.mxu0 0.0
  %657 = vmatmul.mubr.f32.gmra.mrb[0].mxu0 %v537
  %v658 = vpop.f32.mrb[0].mxu0
  %v659 = vadd.f32 0.0, %v658
  %v660 = vpop.f32.mrb[0].mxu0
  %661 = vmatprep.mubr.f32.mxu0 0.0
  %662 = vmatmul.mubr.f32.gmra.mrb[0].mxu0 %v540
  %v663 = vpop.f32.mrb[0].mxu0
  %v664 = vadd.f32 0.0, %v663
  %v665 = vpop.f32.mrb[0].mxu0
  %666 = vmatprep.mubr.f32.mxu0 0.0
  %667 = vmatmul.mubr.f32.gmra.mrb[0].mxu0 %v543
  %v668 = vpop.f32.mrb[0].mxu0
  %v669 = vadd.f32 0.0, %v668
  %v670 = vpop.f32.mrb[0].mxu0
  %671 = vmatprep.mubr.f32.mxu0 0.0
  %672 = vmatmul.mubr.f32.gmra.mrb[0].mxu0 %v546
  %v673 = vpop.f32.mrb[0].mxu0
  %v674 = vadd.f32 0.0, %v673
  %v675 = vpop.f32.mrb[0].mxu0
  %676 = vmatprep.mubr.f32.mxu0 0.0
  %677 = vmatmul.mubr.f32.gmra.mrb[0].mxu0 %v549
  %v678 = vpop.f32.mrb[0].mxu0
  %v679 = vadd.f32 0.0, %v678
  %v680 = vpop.f32.mrb[0].mxu0
  %681 = vmatprep.mubr.f32.mxu0 0.0
  %682 = vmatmul.mubr.f32.gmra.mrb[0].mxu0 %v552
  %v683 = vpop.f32.mrb[0].mxu0
  %v684 = vadd.f32 0.0, %v683
  %v685 = vpop.f32.mrb[0].mxu0
  %686 = vmatprep.mubr.f32.mxu0 0.0
  %687 = vmatmul.mubr.f32.gmra.mrb[0].mxu0 %v555
  %v688 = vpop.f32.mrb[0].mxu0
  %v689 = vadd.f32 0.0, %v688
  %v690 = vpop.f32.mrb[0].mxu0
  %691 = vmatprep.mubr.f32.mxu0 0.0
  %692 = vmatmul.mubr.f32.gmra.mrb[0].mxu0 %v558
  %v693 = vpop.f32.mrb[0].mxu0
  %v694 = vadd.f32 0.0, %v693
  %v695 = vpop.f32.mrb[0].mxu0
  %696 = vmatprep.mubr.f32.mxu0 0.0
  %697 = vmatmul.mubr.f32.gmra.mrb[0].mxu0 %v561
  %v698 = vpop.f32.mrb[0].mxu0
  %v699 = vadd.f32 0.0, %v698
  %v700 = vpop.f32.mrb[0].mxu0
  %701 = vmatprep.mubr.f32.mxu0 0.0
  %702 = vmatmul.mubr.f32.gmra.mrb[0].mxu0 %v564
  %v703 = vpop.f32.mrb[0].mxu0
  %v704 = vadd.f32 0.0, %v703
  %v705 = vpop.f32.mrb[0].mxu0
  %706 = vmatprep.mubr.f32.mxu0 0.0
  %707 = vmatmul.mubr.f32.gmra.mrb[0].mxu0 %v567
  %v708 = vpop.f32.mrb[0].mxu0
  %v709 = vadd.f32 0.0, %v708
  %v710 = vpop.f32.mrb[0].mxu0
  %711 = vmatprep.mubr.f32.mxu0 0.0
  %712 = vmatmul.mubr.f32.gmra.mrb[0].mxu0 %v570
  %v713 = vpop.f32.mrb[0].mxu0
  %v714 = vadd.f32 0.0, %v713
  %v715 = vpop.f32.mrb[0].mxu0
  %716 = vdwg.mxu0
  %717 = vmax.xlane.f32.xlu0 %v639
  %v718 = vpop.xlane.xlu0 %717
  %719 = vmax.xlane.f32.xlu0 %v644
  %v720 = vpop.xlane.xlu0 %719
  %721 = vmax.xlane.f32.xlu0 %v649
  %v722 = vpop.xlane.xlu0 %721
  %723 = vmax.xlane.f32.xlu0 %v654
  %v724 = vpop.xlane.xlu0 %723
  %725 = vmax.xlane.f32.xlu0 %v659
  %v726 = vpop.xlane.xlu0 %725
  %727 = vmax.xlane.f32.xlu0 %v664
  %v728 = vpop.xlane.xlu0 %727
  %729 = vmax.xlane.f32.xlu0 %v669
  %v730 = vpop.xlane.xlu0 %729
  %731 = vmax.xlane.f32.xlu0 %v674
  %v732 = vpop.xlane.xlu0 %731
  %733 = vmax.xlane.f32.xlu0 %v679
  %v734 = vpop.xlane.xlu0 %733
  %735 = vmax.xlane.f32.xlu0 %v684
  %v736 = vpop.xlane.xlu0 %735
  %737 = vmax.xlane.f32.xlu0 %v689
  %v738 = vpop.xlane.xlu0 %737
  %739 = vmax.xlane.f32.xlu0 %v694
  %v740 = vpop.xlane.xlu0 %739
  %741 = vmax.xlane.f32.xlu0 %v699
  %v742 = vpop.xlane.xlu0 %741
  %743 = vmax.xlane.f32.xlu0 %v704
  %v744 = vpop.xlane.xlu0 %743
  %745 = vmax.xlane.f32.xlu0 %v709
  %v746 = vpop.xlane.xlu0 %745
  %747 = vmax.xlane.f32.xlu0 %v714
  %v748 = vpop.xlane.xlu0 %747
  %v749 = vsub.f32 %v639, %v718
  %v750 = vsub.f32 %v644, %v720
  %v751 = vsub.f32 %v649, %v722
  %v752 = vsub.f32 %v654, %v724
  %v753 = vsub.f32 %v659, %v726
  %v754 = vsub.f32 %v664, %v728
  %v755 = vsub.f32 %v669, %v730
  %v756 = vsub.f32 %v674, %v732
  %v757 = vsub.f32 %v679, %v734
  %v758 = vsub.f32 %v684, %v736
  %v759 = vsub.f32 %v689, %v738
  %v760 = vsub.f32 %v694, %v740
  %v761 = vsub.f32 %v699, %v742
  %v762 = vsub.f32 %v704, %v744
  %v763 = vsub.f32 %v709, %v746
  %v764 = vsub.f32 %v714, %v748
  %v765 = vmul.f32 %v749, 1.442695
  %v766 = vpow.pop %v765
  %v767 = vmul.f32 %v750, 1.442695
  %v768 = vpow.pop %v767
  %v769 = vmul.f32 %v751, 1.442695
  %v770 = vpow.pop %v769
  %v771 = vmul.f32 %v752, 1.442695
  %v772 = vpow.pop %v771
  %v773 = vmul.f32 %v753, 1.442695
  %v774 = vpow.pop %v773
  %v775 = vmul.f32 %v754, 1.442695
  %v776 = vpow.pop %v775
  %v777 = vmul.f32 %v755, 1.442695
  %v778 = vpow.pop %v777
  %v779 = vmul.f32 %v756, 1.442695
  %v780 = vpow.pop %v779
  %v781 = vmul.f32 %v757, 1.442695
  %v782 = vpow.pop %v781
  %v783 = vmul.f32 %v758, 1.442695
  %v784 = vpow.pop %v783
  %v785 = vmul.f32 %v759, 1.442695
  %v786 = vpow.pop %v785
  %v787 = vmul.f32 %v760, 1.442695
  %v788 = vpow.pop %v787
  %v789 = vmul.f32 %v761, 1.442695
  %v790 = vpow.pop %v789
  %v791 = vmul.f32 %v762, 1.442695
  %v792 = vpow.pop %v791
  %v793 = vmul.f32 %v763, 1.442695
  %v794 = vpow.pop %v793
  %v795 = vmul.f32 %v764, 1.442695
  %v796 = vpow.pop %v795
  %797 = vadd.xlane.f32.xlu0 %v766
  %v798 = vpop.xlane.xlu0 %797
  %799 = vadd.xlane.f32.xlu0 %v768
  %v800 = vpop.xlane.xlu0 %799
  %801 = vadd.xlane.f32.xlu0 %v770
  %v802 = vpop.xlane.xlu0 %801
  %803 = vadd.xlane.f32.xlu0 %v772
  %v804 = vpop.xlane.xlu0 %803
  %805 = vadd.xlane.f32.xlu0 %v774
  %v806 = vpop.xlane.xlu0 %805
  %807 = vadd.xlane.f32.xlu0 %v776
  %v808 = vpop.xlane.xlu0 %807
  %809 = vadd.xlane.f32.xlu0 %v778
  %v810 = vpop.xlane.xlu0 %809
  %811 = vadd.xlane.f32.xlu0 %v780
  %v812 = vpop.xlane.xlu0 %811
  %813 = vadd.xlane.f32.xlu0 %v782
  %v814 = vpop.xlane.xlu0 %813
  %815 = vadd.xlane.f32.xlu0 %v784
  %v816 = vpop.xlane.xlu0 %815
  %817 = vadd.xlane.f32.xlu0 %v786
  %v818 = vpop.xlane.xlu0 %817
  %819 = vadd.xlane.f32.xlu0 %v788
  %v820 = vpop.xlane.xlu0 %819
  %821 = vadd.xlane.f32.xlu0 %v790
  %v822 = vpop.xlane.xlu0 %821
  %823 = vadd.xlane.f32.xlu0 %v792
  %v824 = vpop.xlane.xlu0 %823
  %825 = vadd.xlane.f32.xlu0 %v794
  %v826 = vpop.xlane.xlu0 %825
  %827 = vadd.xlane.f32.xlu0 %v796
  %v828 = vpop.xlane.xlu0 %827
  %v829 = vrcp.pop %v798
  %v830 = vrcp.pop %v800
  %v831 = vrcp.pop %v802
  %v832 = vrcp.pop %v804
  %v833 = vrcp.pop %v806
  %v834 = vrcp.pop %v808
  %v835 = vrcp.pop %v810
  %v836 = vrcp.pop %v812
  %v837 = vrcp.pop %v814
  %v838 = vrcp.pop %v816
  %v839 = vrcp.pop %v818
  %v840 = vrcp.pop %v820
  %v841 = vrcp.pop %v822
  %v842 = vrcp.pop %v824
  %v843 = vrcp.pop %v826
  %v844 = vrcp.pop %v828
  %v845 = vmul.f32 %v766, %v829
  %v846 = vmul.f32 %v768, %v830
  %v847 = vmul.f32 %v770, %v831
  %v848 = vmul.f32 %v772, %v832
  %v849 = vmul.f32 %v774, %v833
  %v850 = vmul.f32 %v776, %v834
  %v851 = vmul.f32 %v778, %v835
  %v852 = vmul.f32 %v780, %v836
  %v853 = vmul.f32 %v782, %v837
  %v854 = vmul.f32 %v784, %v838
  %v855 = vmul.f32 %v786, %v839
  %v856 = vmul.f32 %v788, %v840
  %v857 = vmul.f32 %v790, %v841
  %v858 = vmul.f32 %v792, %v842
  %v859 = vmul.f32 %v794, %v843
  %v860 = vmul.f32 %v796, %v844
  %v861 = vadd.f32 %v845, %v846
  %v862 = vadd.f32 %v861, %v847
  %v863 = vadd.f32 %v862, %v848
  %v864 = vadd.f32 %v863, %v849
  %v865 = vadd.f32 %v864, %v850
  %v866 = vadd.f32 %v865, %v851
  %v867 = vadd.f32 %v866, %v852
  %v868 = vadd.f32 %v867, %v853
  %v869 = vadd.f32 %v868, %v854
  %v870 = vadd.f32 %v869, %v855
  %v871 = vadd.f32 %v870, %v856
  %v872 = vadd.f32 %v871, %v857
  %v873 = vadd.f32 %v872, %v858
  %v874 = vadd.f32 %v873, %v859
  %v875 = vadd.f32 %v874, %v860
  %v876 = vrot.slane %v875, 4
  %v877 = vadd.f32 %v875, %v876
  %v878 = vrot.slane %v877, 2
  %v879 = vadd.f32 %v877, %v878
  %v880 = vrot.slane %v879, 1
  %v881 = vadd.f32 %v879, %v880
  %882 = vmatprep.subr.mxu0 0.0
  %883 = vmatpush1.msra.mxu0 %v845
  %884 = vmatprep.subr.mxu0 0.0
  %885 = vmatpush1.msra.mxu0 %v846
  %886 = vmatprep.subr.mxu0 0.0
  %887 = vmatpush1.msra.mxu0 %v847
  %888 = vmatprep.subr.mxu0 0.0
  %889 = vmatpush1.msra.mxu0 %v848
  %890 = vmatprep.subr.mxu0 0.0
  %891 = vmatpush1.msra.mxu0 %v849
  %892 = vmatprep.subr.mxu0 0.0
  %893 = vmatpush1.msra.mxu0 %v850
  %894 = vmatprep.subr.mxu0 0.0
  %895 = vmatpush1.msra.mxu0 %v851
  %896 = vmatprep.subr.mxu0 0.0
  %897 = vmatpush1.msra.mxu0 %v852
  %898 = vmatprep.subr.mxu0 0.0
  %899 = vmatpush1.msra.mxu0 %v853
  %900 = vmatprep.subr.mxu0 0.0
  %901 = vmatpush1.msra.mxu0 %v854
  %902 = vmatprep.subr.mxu0 0.0
  %903 = vmatpush1.msra.mxu0 %v855
  %904 = vmatprep.subr.mxu0 0.0
  %905 = vmatpush1.msra.mxu0 %v856
  %906 = vmatprep.subr.mxu0 0.0
  %907 = vmatpush1.msra.mxu0 %v857
  %908 = vmatprep.subr.mxu0 0.0
  %909 = vmatpush1.msra.mxu0 %v858
  %910 = vmatprep.subr.mxu0 0.0
  %911 = vmatpush1.msra.mxu0 %v859
  %912 = vmatprep.subr.mxu0 0.0
  %913 = vmatpush1.msra.mxu0 %v860
  %914 = vmatprep.subr.mxu0 0.0
  %915 = vmatpush1.msra.mxu0 0.0
  %916 = vmatprep.subr.mxu0 0.0
  %917 = vmatpush1.msra.mxu0 0.0
  %918 = vmatprep.subr.mxu0 0.0
  %919 = vmatpush1.msra.mxu0 0.0
  %920 = vmatprep.subr.mxu0 0.0
  %921 = vmatpush1.msra.mxu0 0.0
  %922 = vmatprep.subr.mxu0 0.0
  %923 = vmatpush1.msra.mxu0 0.0
  %924 = vmatprep.subr.mxu0 0.0
  %925 = vmatpush1.msra.mxu0 0.0
  %926 = vmatprep.subr.mxu0 0.0
  %927 = vmatpush1.msra.mxu0 0.0
  %928 = vmatprep.subr.mxu0 0.0
  %929 = vmatpush1.msra.mxu0 0.0
  %930 = vmatprep.subr.mxu0 0.0
  %931 = vmatpush1.msra.mxu0 0.0
  %932 = vmatprep.subr.mxu0 0.0
  %933 = vmatpush1.msra.mxu0 0.0
  %934 = vmatprep.subr.mxu0 0.0
  %935 = vmatpush1.msra.mxu0 0.0
  %936 = vmatprep.subr.mxu0 0.0
  %937 = vmatpush1.msra.mxu0 0.0
  %938 = vmatprep.subr.mxu0 0.0
  %939 = vmatpush1.msra.mxu0 0.0
  %940 = vmatprep.subr.mxu0 0.0
  %941 = vmatpush1.msra.mxu0 0.0
  %942 = vmatprep.subr.mxu0 0.0
  %943 = vmatpush1.msra.mxu0 0.0
  %944 = vmatprep.subr.mxu0 0.0
  %945 = vmatpush1.msra.mxu0 0.0
  %946 = vmatprep.mubr.f32.mxu0 0.0
  %947 = vmatmul.mubr.f32.gmra.mrb[0].mxu0 %v397
  %v948 = vpop.f32.mrb[0].mxu0
  %v949 = vadd.f32 0.0, %v948
  %v950 = vpop.f32.mrb[0].mxu0
  %951 = vmatprep.mubr.f32.mxu0 0.0
  %952 = vmatmul.mubr.f32.gmra.mrb[0].mxu0 %v403
  %v953 = vpop.f32.mrb[0].mxu0
  %v954 = vadd.f32 0.0, %v953
  %v955 = vpop.f32.mrb[0].mxu0
  %956 = vmatprep.mubr.f32.mxu0 0.0
  %957 = vmatmul.mubr.f32.gmra.mrb[0].mxu0 %v409
  %v958 = vpop.f32.mrb[0].mxu0
  %v959 = vadd.f32 0.0, %v958
  %v960 = vpop.f32.mrb[0].mxu0
  %961 = vmatprep.mubr.f32.mxu0 0.0
  %962 = vmatmul.mubr.f32.gmra.mrb[0].mxu0 %v415
  %v963 = vpop.f32.mrb[0].mxu0
  %v964 = vadd.f32 0.0, %v963
  %v965 = vpop.f32.mrb[0].mxu0
  %966 = vmatprep.mubr.f32.mxu0 0.0
  %967 = vmatmul.mubr.f32.gmra.mrb[0].mxu0 %v421
  %v968 = vpop.f32.mrb[0].mxu0
  %v969 = vadd.f32 0.0, %v968
  %v970 = vpop.f32.mrb[0].mxu0
  %971 = vmatprep.mubr.f32.mxu0 0.0
  %972 = vmatmul.mubr.f32.gmra.mrb[0].mxu0 %v427
  %v973 = vpop.f32.mrb[0].mxu0
  %v974 = vadd.f32 0.0, %v973
  %v975 = vpop.f32.mrb[0].mxu0
  %976 = vmatprep.mubr.f32.mxu0 0.0
  %977 = vmatmul.mubr.f32.gmra.mrb[0].mxu0 %v433
  %v978 = vpop.f32.mrb[0].mxu0
  %v979 = vadd.f32 0.0, %v978
  %v980 = vpop.f32.mrb[0].mxu0
  %981 = vmatprep.mubr.f32.mxu0 0.0
  %982 = vmatmul.mubr.f32.gmra.mrb[0].mxu0 %v439
  %v983 = vpop.f32.mrb[0].mxu0
  %v984 = vadd.f32 0.0, %v983
  %v985 = vpop.f32.mrb[0].mxu0
  %986 = vmatprep.mubr.f32.mxu0 0.0
  %987 = vmatmul.mubr.f32.gmra.mrb[0].mxu0 %v445
  %v988 = vpop.f32.mrb[0].mxu0
  %v989 = vadd.f32 0.0, %v988
  %v990 = vpop.f32.mrb[0].mxu0
  %991 = vmatprep.mubr.f32.mxu0 0.0
  %992 = vmatmul.mubr.f32.gmra.mrb[0].mxu0 %v451
  %v993 = vpop.f32.mrb[0].mxu0
  %v994 = vadd.f32 0.0, %v993
  %v995 = vpop.f32.mrb[0].mxu0
  %996 = vmatprep.mubr.f32.mxu0 0.0
  %997 = vmatmul.mubr.f32.gmra.mrb[0].mxu0 %v457
  %v998 = vpop.f32.mrb[0].mxu0
  %v999 = vadd.f32 0.0, %v998
  %v1000 = vpop.f32.mrb[0].mxu0
  %1001 = vmatprep.mubr.f32.mxu0 0.0
  %1002 = vmatmul.mubr.f32.gmra.mrb[0].mxu0 %v463
  %v1003 = vpop.f32.mrb[0].mxu0
  %v1004 = vadd.f32 0.0, %v1003
  %v1005 = vpop.f32.mrb[0].mxu0
  %1006 = vmatprep.mubr.f32.mxu0 0.0
  %1007 = vmatmul.mubr.f32.gmra.mrb[0].mxu0 %v469
  %v1008 = vpop.f32.mrb[0].mxu0
  %v1009 = vadd.f32 0.0, %v1008
  %v1010 = vpop.f32.mrb[0].mxu0
  %1011 = vmatprep.mubr.f32.mxu0 0.0
  %1012 = vmatmul.mubr.f32.gmra.mrb[0].mxu0 %v475
  %v1013 = vpop.f32.mrb[0].mxu0
  %v1014 = vadd.f32 0.0, %v1013
  %v1015 = vpop.f32.mrb[0].mxu0
  %1016 = vmatprep.mubr.f32.mxu0 0.0
  %1017 = vmatmul.mubr.f32.gmra.mrb[0].mxu0 %v481
  %v1018 = vpop.f32.mrb[0].mxu0
  %v1019 = vadd.f32 0.0, %v1018
  %v1020 = vpop.f32.mrb[0].mxu0
  %1021 = vmatprep.mubr.f32.mxu0 0.0
  %1022 = vmatmul.mubr.f32.gmra.mrb[0].mxu0 %v487
  %v1023 = vpop.f32.mrb[0].mxu0
  %v1024 = vadd.f32 0.0, %v1023
  %v1025 = vpop.f32.mrb[0].mxu0
  %1026 = vdwg.mxu0
  %v1027 = vadd.f32 %v881, 1e-09
  %v1028 = vrcp.pop %v1027
  %v1029 = vmul.f32 %v949, %v1028
  %v1030 = vmul.f32 %v954, %v1028
  %v1031 = vmul.f32 %v959, %v1028
  %v1032 = vmul.f32 %v964, %v1028
  %v1033 = vmul.f32 %v969, %v1028
  %v1034 = vmul.f32 %v974, %v1028
  %v1035 = vmul.f32 %v979, %v1028
  %v1036 = vmul.f32 %v984, %v1028
  %v1037 = vmul.f32 %v989, %v1028
  %v1038 = vmul.f32 %v994, %v1028
  %v1039 = vmul.f32 %v999, %v1028
  %v1040 = vmul.f32 %v1004, %v1028
  %v1041 = vmul.f32 %v1009, %v1028
  %v1042 = vmul.f32 %v1014, %v1028
  %v1043 = vmul.f32 %v1019, %v1028
  %v1044 = vmul.f32 %v1024, %v1028
  %v1045 = vsub.f32 %v29, %v1029
  %v1046 = vsub.f32 %v31, %v1030
  %v1047 = vsub.f32 %v33, %v1031
  %v1048 = vsub.f32 %v35, %v1032
  %v1049 = vsub.f32 %v37, %v1033
  %v1050 = vsub.f32 %v39, %v1034
  %v1051 = vsub.f32 %v41, %v1035
  %v1052 = vsub.f32 %v43, %v1036
  %v1053 = vsub.f32 %v45, %v1037
  %v1054 = vsub.f32 %v47, %v1038
  %v1055 = vsub.f32 %v49, %v1039
  %v1056 = vsub.f32 %v51, %v1040
  %v1057 = vsub.f32 %v53, %v1041
  %v1058 = vsub.f32 %v55, %v1042
  %v1059 = vsub.f32 %v57, %v1043
  %v1060 = vsub.f32 %v59, %v1044
  %1061 = vst [vmem:[#allocation2] sm:$0xff] %v1045
  %1062 = vst [vmem:[#allocation2 + $0x10] sm:$0xff] %v1046
  %1063 = vst [vmem:[#allocation2 + $0x20] sm:$0xff] %v1047
  %1064 = vst [vmem:[#allocation2 + $0x30] sm:$0xff] %v1048
  %1065 = vst [vmem:[#allocation2 + $0x40] sm:$0xff] %v1049
  %1066 = vst [vmem:[#allocation2 + $0x50] sm:$0xff] %v1050
  %1067 = vst [vmem:[#allocation2 + $0x60] sm:$0xff] %v1051
  %1068 = vst [vmem:[#allocation2 + $0x70] sm:$0xff] %v1052
  %1069 = vst [vmem:[#allocation2 + $0x80] sm:$0xff] %v1053
  %1070 = vst [vmem:[#allocation2 + $0x90] sm:$0xff] %v1054
  %1071 = vst [vmem:[#allocation2 + $0xa0] sm:$0xff] %v1055
  %1072 = vst [vmem:[#allocation2 + $0xb0] sm:$0xff] %v1056
  %1073 = vst [vmem:[#allocation2 + $0xc0] sm:$0xff] %v1057
  %1074 = vst [vmem:[#allocation2 + $0xd0] sm:$0xff] %v1058
  %1075 = vst [vmem:[#allocation2 + $0xe0] sm:$0xff] %v1059
  %1076 = vst [vmem:[#allocation2 + $0xf0] sm:$0xff] %v1060
  %1077 = vxpose.xlu0.b32.start [1/16] %v230, 128
  %1078 = vxpose.xlu0.b32.cont [2/16] %v236, 128
  %1079 = vxpose.xlu0.b32.cont [3/16] %v242, 128
  %1080 = vxpose.xlu0.b32.cont [4/16] %v248, 128
  %1081 = vxpose.xlu0.b32.cont [5/16] 0.0, 128
  %1082 = vxpose.xlu0.b32.cont [6/16] 0.0, 128
  %1083 = vxpose.xlu0.b32.cont [7/16] 0.0, 128
  %1084 = vxpose.xlu0.b32.cont [8/16] 0.0, 128
  %1085 = vxpose.xlu0.b32.cont [9/16] 0.0, 128
  %1086 = vxpose.xlu0.b32.cont [10/16] 0.0, 128
  %1087 = vxpose.xlu0.b32.cont [11/16] 0.0, 128
  %1088 = vxpose.xlu0.b32.cont [12/16] 0.0, 128
  %1089 = vxpose.xlu0.b32.cont [13/16] 0.0, 128
  %1090 = vxpose.xlu0.b32.cont [14/16] 0.0, 128
  %1091 = vxpose.xlu0.b32.cont [15/16] 0.0, 128
  %1092 = vxpose.xlu0.b32.end [16/16] 0.0, 128
  %v1093 = vpop.trf.xlu0
  %v1094 = vpop.trf.xlu0
  %v1095 = vpop.trf.xlu0
  %v1096 = vpop.trf.xlu0
  %v1097 = vpop.trf.xlu0
  %v1098 = vpop.trf.xlu0
  %v1099 = vpop.trf.xlu0
  %v1100 = vpop.trf.xlu0
  %v1101 = vpop.trf.xlu0
  %v1102 = vpop.trf.xlu0
  %v1103 = vpop.trf.xlu0
  %v1104 = vpop.trf.xlu0
  %v1105 = vpop.trf.xlu0
  %v1106 = vpop.trf.xlu0
  %v1107 = vpop.trf.xlu0
  %v1108 = vpop.trf.xlu0
  %v1110 = vsel %vm523, %v1093, 0
  %v1113 = vsel %vm523, %v1094, 0
  %v1116 = vsel %vm523, %v1095, 0
  %v1119 = vsel %vm523, %v1096, 0
  %v1122 = vsel %vm523, %v1097, 0
  %v1125 = vsel %vm523, %v1098, 0
  %v1128 = vsel %vm523, %v1099, 0
  %v1131 = vsel %vm523, %v1100, 0
  %v1134 = vsel %vm523, %v1101, 0
  %v1137 = vsel %vm523, %v1102, 0
  %v1140 = vsel %vm523, %v1103, 0
  %v1143 = vsel %vm523, %v1104, 0
  %v1146 = vsel %vm523, %v1105, 0
  %v1149 = vsel %vm523, %v1106, 0
  %v1152 = vsel %vm523, %v1107, 0
  %v1155 = vsel %vm523, %v1108, 0
  %1157 = vmatprep.subr.mxu0 0.0
  %1158 = vmatpush1.msra.mxu0 %v230
  %1159 = vmatprep.subr.mxu0 0.0
  %1160 = vmatpush1.msra.mxu0 %v236
  %1161 = vmatprep.subr.mxu0 0.0
  %1162 = vmatpush1.msra.mxu0 %v242
  %1163 = vmatprep.subr.mxu0 0.0
  %1164 = vmatpush1.msra.mxu0 %v248
  %1165 = vmatprep.subr.mxu0 0.0
  %1166 = vmatpush1.msra.mxu0 0.0
  %1167 = vmatprep.subr.mxu0 0.0
  %1168 = vmatpush1.msra.mxu0 0.0
  %1169 = vmatprep.subr.mxu0 0.0
  %1170 = vmatpush1.msra.mxu0 0.0
  %1171 = vmatprep.subr.mxu0 0.0
  %1172 = vmatpush1.msra.mxu0 0.0
  %1173 = vmatprep.subr.mxu0 0.0
  %1174 = vmatpush1.msra.mxu0 0.0
  %1175 = vmatprep.subr.mxu0 0.0
  %1176 = vmatpush1.msra.mxu0 0.0
  %1177 = vmatprep.subr.mxu0 0.0
  %1178 = vmatpush1.msra.mxu0 0.0
  %1179 = vmatprep.subr.mxu0 0.0
  %1180 = vmatpush1.msra.mxu0 0.0
  %1181 = vmatprep.subr.mxu0 0.0
  %1182 = vmatpush1.msra.mxu0 0.0
  %1183 = vmatprep.subr.mxu0 0.0
  %1184 = vmatpush1.msra.mxu0 0.0
  %1185 = vmatprep.subr.mxu0 0.0
  %1186 = vmatpush1.msra.mxu0 0.0
  %1187 = vmatprep.subr.mxu0 0.0
  %1188 = vmatpush1.msra.mxu0 0.0
  %1189 = vmatprep.subr.mxu0 0.0
  %1190 = vmatpush1.msra.mxu0 0.0
  %1191 = vmatprep.subr.mxu0 0.0
  %1192 = vmatpush1.msra.mxu0 0.0
  %1193 = vmatprep.subr.mxu0 0.0
  %1194 = vmatpush1.msra.mxu0 0.0
  %1195 = vmatprep.subr.mxu0 0.0
  %1196 = vmatpush1.msra.mxu0 0.0
  %1197 = vmatprep.subr.mxu0 0.0
  %1198 = vmatpush1.msra.mxu0 0.0
  %1199 = vmatprep.subr.mxu0 0.0
  %1200 = vmatpush1.msra.mxu0 0.0
  %1201 = vmatprep.subr.mxu0 0.0
  %1202 = vmatpush1.msra.mxu0 0.0
  %1203 = vmatprep.subr.mxu0 0.0
  %1204 = vmatpush1.msra.mxu0 0.0
  %1205 = vmatprep.subr.mxu0 0.0
  %1206 = vmatpush1.msra.mxu0 0.0
  %1207 = vmatprep.subr.mxu0 0.0
  %1208 = vmatpush1.msra.mxu0 0.0
  %1209 = vmatprep.subr.mxu0 0.0
  %1210 = vmatpush1.msra.mxu0 0.0
  %1211 = vmatprep.subr.mxu0 0.0
  %1212 = vmatpush1.msra.mxu0 0.0
  %1213 = vmatprep.subr.mxu0 0.0
  %1214 = vmatpush1.msra.mxu0 0.0
  %1215 = vmatprep.subr.mxu0 0.0
  %1216 = vmatpush1.msra.mxu0 0.0
  %1217 = vmatprep.subr.mxu0 0.0
  %1218 = vmatpush1.msra.mxu0 0.0
  %1219 = vmatprep.subr.mxu0 0.0
  %1220 = vmatpush1.msra.mxu0 0.0
  %1221 = vmatprep.mubr.f32.mxu0 0.0
  %1222 = vmatmul.mubr.f32.gmra.mrb[0].mxu0 %v1110
  %v1223 = vpop.f32.mrb[0].mxu0
  %v1224 = vadd.f32 0.0, %v1223
  %v1225 = vpop.f32.mrb[0].mxu0
  %1226 = vmatprep.mubr.f32.mxu0 0.0
  %1227 = vmatmul.mubr.f32.gmra.mrb[0].mxu0 %v1113
  %v1228 = vpop.f32.mrb[0].mxu0
  %v1229 = vadd.f32 0.0, %v1228
  %v1230 = vpop.f32.mrb[0].mxu0
  %1231 = vmatprep.mubr.f32.mxu0 0.0
  %1232 = vmatmul.mubr.f32.gmra.mrb[0].mxu0 %v1116
  %v1233 = vpop.f32.mrb[0].mxu0
  %v1234 = vadd.f32 0.0, %v1233
  %v1235 = vpop.f32.mrb[0].mxu0
  %1236 = vmatprep.mubr.f32.mxu0 0.0
  %1237 = vmatmul.mubr.f32.gmra.mrb[0].mxu0 %v1119
  %v1238 = vpop.f32.mrb[0].mxu0
  %v1239 = vadd.f32 0.0, %v1238
  %v1240 = vpop.f32.mrb[0].mxu0
  %1241 = vmatprep.mubr.f32.mxu0 0.0
  %1242 = vmatmul.mubr.f32.gmra.mrb[0].mxu0 %v1122
  %v1243 = vpop.f32.mrb[0].mxu0
  %v1244 = vadd.f32 0.0, %v1243
  %v1245 = vpop.f32.mrb[0].mxu0
  %1246 = vmatprep.mubr.f32.mxu0 0.0
  %1247 = vmatmul.mubr.f32.gmra.mrb[0].mxu0 %v1125
  %v1248 = vpop.f32.mrb[0].mxu0
  %v1249 = vadd.f32 0.0, %v1248
  %v1250 = vpop.f32.mrb[0].mxu0
  %1251 = vmatprep.mubr.f32.mxu0 0.0
  %1252 = vmatmul.mubr.f32.gmra.mrb[0].mxu0 %v1128
  %v1253 = vpop.f32.mrb[0].mxu0
  %v1254 = vadd.f32 0.0, %v1253
  %v1255 = vpop.f32.mrb[0].mxu0
  %1256 = vmatprep.mubr.f32.mxu0 0.0
  %1257 = vmatmul.mubr.f32.gmra.mrb[0].mxu0 %v1131
  %v1258 = vpop.f32.mrb[0].mxu0
  %v1259 = vadd.f32 0.0, %v1258
  %v1260 = vpop.f32.mrb[0].mxu0
  %1261 = vmatprep.mubr.f32.mxu0 0.0
  %1262 = vmatmul.mubr.f32.gmra.mrb[0].mxu0 %v1134
  %v1263 = vpop.f32.mrb[0].mxu0
  %v1264 = vadd.f32 0.0, %v1263
  %v1265 = vpop.f32.mrb[0].mxu0
  %1266 = vmatprep.mubr.f32.mxu0 0.0
  %1267 = vmatmul.mubr.f32.gmra.mrb[0].mxu0 %v1137
  %v1268 = vpop.f32.mrb[0].mxu0
  %v1269 = vadd.f32 0.0, %v1268
  %v1270 = vpop.f32.mrb[0].mxu0
  %1271 = vmatprep.mubr.f32.mxu0 0.0
  %1272 = vmatmul.mubr.f32.gmra.mrb[0].mxu0 %v1140
  %v1273 = vpop.f32.mrb[0].mxu0
  %v1274 = vadd.f32 0.0, %v1273
  %v1275 = vpop.f32.mrb[0].mxu0
  %1276 = vmatprep.mubr.f32.mxu0 0.0
  %1277 = vmatmul.mubr.f32.gmra.mrb[0].mxu0 %v1143
  %v1278 = vpop.f32.mrb[0].mxu0
  %v1279 = vadd.f32 0.0, %v1278
  %v1280 = vpop.f32.mrb[0].mxu0
  %1281 = vmatprep.mubr.f32.mxu0 0.0
  %1282 = vmatmul.mubr.f32.gmra.mrb[0].mxu0 %v1146
  %v1283 = vpop.f32.mrb[0].mxu0
  %v1284 = vadd.f32 0.0, %v1283
  %v1285 = vpop.f32.mrb[0].mxu0
  %1286 = vmatprep.mubr.f32.mxu0 0.0
  %1287 = vmatmul.mubr.f32.gmra.mrb[0].mxu0 %v1149
  %v1288 = vpop.f32.mrb[0].mxu0
  %v1289 = vadd.f32 0.0, %v1288
  %v1290 = vpop.f32.mrb[0].mxu0
  %1291 = vmatprep.mubr.f32.mxu0 0.0
  %1292 = vmatmul.mubr.f32.gmra.mrb[0].mxu0 %v1152
  %v1293 = vpop.f32.mrb[0].mxu0
  %v1294 = vadd.f32 0.0, %v1293
  %v1295 = vpop.f32.mrb[0].mxu0
  %1296 = vmatprep.mubr.f32.mxu0 0.0
  %1297 = vmatmul.mubr.f32.gmra.mrb[0].mxu0 %v1155
  %v1298 = vpop.f32.mrb[0].mxu0
  %v1299 = vadd.f32 0.0, %v1298
  %v1300 = vpop.f32.mrb[0].mxu0
  %1301 = vdwg.mxu0
  %1302 = vmax.xlane.f32.xlu0 %v1224
  %v1303 = vpop.xlane.xlu0 %1302
  %1304 = vmax.xlane.f32.xlu0 %v1229
  %v1305 = vpop.xlane.xlu0 %1304
  %1306 = vmax.xlane.f32.xlu0 %v1234
  %v1307 = vpop.xlane.xlu0 %1306
  %1308 = vmax.xlane.f32.xlu0 %v1239
  %v1309 = vpop.xlane.xlu0 %1308
  %1310 = vmax.xlane.f32.xlu0 %v1244
  %v1311 = vpop.xlane.xlu0 %1310
  %1312 = vmax.xlane.f32.xlu0 %v1249
  %v1313 = vpop.xlane.xlu0 %1312
  %1314 = vmax.xlane.f32.xlu0 %v1254
  %v1315 = vpop.xlane.xlu0 %1314
  %1316 = vmax.xlane.f32.xlu0 %v1259
  %v1317 = vpop.xlane.xlu0 %1316
  %1318 = vmax.xlane.f32.xlu0 %v1264
  %v1319 = vpop.xlane.xlu0 %1318
  %1320 = vmax.xlane.f32.xlu0 %v1269
  %v1321 = vpop.xlane.xlu0 %1320
  %1322 = vmax.xlane.f32.xlu0 %v1274
  %v1323 = vpop.xlane.xlu0 %1322
  %1324 = vmax.xlane.f32.xlu0 %v1279
  %v1325 = vpop.xlane.xlu0 %1324
  %1326 = vmax.xlane.f32.xlu0 %v1284
  %v1327 = vpop.xlane.xlu0 %1326
  %1328 = vmax.xlane.f32.xlu0 %v1289
  %v1329 = vpop.xlane.xlu0 %1328
  %1330 = vmax.xlane.f32.xlu0 %v1294
  %v1331 = vpop.xlane.xlu0 %1330
  %1332 = vmax.xlane.f32.xlu0 %v1299
  %v1333 = vpop.xlane.xlu0 %1332
  %v1334 = vsub.f32 %v1224, %v1303
  %v1335 = vsub.f32 %v1229, %v1305
  %v1336 = vsub.f32 %v1234, %v1307
  %v1337 = vsub.f32 %v1239, %v1309
  %v1338 = vsub.f32 %v1244, %v1311
  %v1339 = vsub.f32 %v1249, %v1313
  %v1340 = vsub.f32 %v1254, %v1315
  %v1341 = vsub.f32 %v1259, %v1317
  %v1342 = vsub.f32 %v1264, %v1319
  %v1343 = vsub.f32 %v1269, %v1321
  %v1344 = vsub.f32 %v1274, %v1323
  %v1345 = vsub.f32 %v1279, %v1325
  %v1346 = vsub.f32 %v1284, %v1327
  %v1347 = vsub.f32 %v1289, %v1329
  %v1348 = vsub.f32 %v1294, %v1331
  %v1349 = vsub.f32 %v1299, %v1333
  %v1350 = vmul.f32 %v1334, 1.442695
  %v1351 = vpow.pop %v1350
  %v1352 = vmul.f32 %v1335, 1.442695
  %v1353 = vpow.pop %v1352
  %v1354 = vmul.f32 %v1336, 1.442695
  %v1355 = vpow.pop %v1354
  %v1356 = vmul.f32 %v1337, 1.442695
  %v1357 = vpow.pop %v1356
  %v1358 = vmul.f32 %v1338, 1.442695
  %v1359 = vpow.pop %v1358
  %v1360 = vmul.f32 %v1339, 1.442695
  %v1361 = vpow.pop %v1360
  %v1362 = vmul.f32 %v1340, 1.442695
  %v1363 = vpow.pop %v1362
  %v1364 = vmul.f32 %v1341, 1.442695
  %v1365 = vpow.pop %v1364
  %v1366 = vmul.f32 %v1342, 1.442695
  %v1367 = vpow.pop %v1366
  %v1368 = vmul.f32 %v1343, 1.442695
  %v1369 = vpow.pop %v1368
  %v1370 = vmul.f32 %v1344, 1.442695
  %v1371 = vpow.pop %v1370
  %v1372 = vmul.f32 %v1345, 1.442695
  %v1373 = vpow.pop %v1372
  %v1374 = vmul.f32 %v1346, 1.442695
  %v1375 = vpow.pop %v1374
  %v1376 = vmul.f32 %v1347, 1.442695
  %v1377 = vpow.pop %v1376
  %v1378 = vmul.f32 %v1348, 1.442695
  %v1379 = vpow.pop %v1378
  %v1380 = vmul.f32 %v1349, 1.442695
  %v1381 = vpow.pop %v1380
  %1382 = vadd.xlane.f32.xlu0 %v1351
  %v1383 = vpop.xlane.xlu0 %1382
  %1384 = vadd.xlane.f32.xlu0 %v1353
  %v1385 = vpop.xlane.xlu0 %1384
  %1386 = vadd.xlane.f32.xlu0 %v1355
  %v1387 = vpop.xlane.xlu0 %1386
  %1388 = vadd.xlane.f32.xlu0 %v1357
  %v1389 = vpop.xlane.xlu0 %1388
  %1390 = vadd.xlane.f32.xlu0 %v1359
  %v1391 = vpop.xlane.xlu0 %1390
  %1392 = vadd.xlane.f32.xlu0 %v1361
  %v1393 = vpop.xlane.xlu0 %1392
  %1394 = vadd.xlane.f32.xlu0 %v1363
  %v1395 = vpop.xlane.xlu0 %1394
  %1396 = vadd.xlane.f32.xlu0 %v1365
  %v1397 = vpop.xlane.xlu0 %1396
  %1398 = vadd.xlane.f32.xlu0 %v1367
  %v1399 = vpop.xlane.xlu0 %1398
  %1400 = vadd.xlane.f32.xlu0 %v1369
  %v1401 = vpop.xlane.xlu0 %1400
  %1402 = vadd.xlane.f32.xlu0 %v1371
  %v1403 = vpop.xlane.xlu0 %1402
  %1404 = vadd.xlane.f32.xlu0 %v1373
  %v1405 = vpop.xlane.xlu0 %1404
  %1406 = vadd.xlane.f32.xlu0 %v1375
  %v1407 = vpop.xlane.xlu0 %1406
  %1408 = vadd.xlane.f32.xlu0 %v1377
  %v1409 = vpop.xlane.xlu0 %1408
  %1410 = vadd.xlane.f32.xlu0 %v1379
  %v1411 = vpop.xlane.xlu0 %1410
  %1412 = vadd.xlane.f32.xlu0 %v1381
  %v1413 = vpop.xlane.xlu0 %1412
  %v1414 = vrcp.pop %v1383
  %v1415 = vrcp.pop %v1385
  %v1416 = vrcp.pop %v1387
  %v1417 = vrcp.pop %v1389
  %v1418 = vrcp.pop %v1391
  %v1419 = vrcp.pop %v1393
  %v1420 = vrcp.pop %v1395
  %v1421 = vrcp.pop %v1397
  %v1422 = vrcp.pop %v1399
  %v1423 = vrcp.pop %v1401
  %v1424 = vrcp.pop %v1403
  %v1425 = vrcp.pop %v1405
  %v1426 = vrcp.pop %v1407
  %v1427 = vrcp.pop %v1409
  %v1428 = vrcp.pop %v1411
  %v1429 = vrcp.pop %v1413
  %v1430 = vmul.f32 %v1351, %v1414
  %v1431 = vmul.f32 %v1353, %v1415
  %v1432 = vmul.f32 %v1355, %v1416
  %v1433 = vmul.f32 %v1357, %v1417
  %v1434 = vmul.f32 %v1359, %v1418
  %v1435 = vmul.f32 %v1361, %v1419
  %v1436 = vmul.f32 %v1363, %v1420
  %v1437 = vmul.f32 %v1365, %v1421
  %v1438 = vmul.f32 %v1367, %v1422
  %v1439 = vmul.f32 %v1369, %v1423
  %v1440 = vmul.f32 %v1371, %v1424
  %v1441 = vmul.f32 %v1373, %v1425
  %v1442 = vmul.f32 %v1375, %v1426
  %v1443 = vmul.f32 %v1377, %v1427
  %v1444 = vmul.f32 %v1379, %v1428
  %v1445 = vmul.f32 %v1381, %v1429
  %v1446 = vadd.f32 %v1430, %v1431
  %v1447 = vadd.f32 %v1446, %v1432
  %v1448 = vadd.f32 %v1447, %v1433
  %v1449 = vadd.f32 %v1448, %v1434
  %v1450 = vadd.f32 %v1449, %v1435
  %v1451 = vadd.f32 %v1450, %v1436
  %v1452 = vadd.f32 %v1451, %v1437
  %v1453 = vadd.f32 %v1452, %v1438
  %v1454 = vadd.f32 %v1453, %v1439
  %v1455 = vadd.f32 %v1454, %v1440
  %v1456 = vadd.f32 %v1455, %v1441
  %v1457 = vadd.f32 %v1456, %v1442
  %v1458 = vadd.f32 %v1457, %v1443
  %v1459 = vadd.f32 %v1458, %v1444
  %v1460 = vadd.f32 %v1459, %v1445
  %v1461 = vrot.slane %v1460, 4
  %v1462 = vadd.f32 %v1460, %v1461
  %v1463 = vrot.slane %v1462, 2
  %v1464 = vadd.f32 %v1462, %v1463
  %v1465 = vrot.slane %v1464, 1
  %v1466 = vadd.f32 %v1464, %v1465
  %1467 = vmatprep.subr.mxu0 0.0
  %1468 = vmatpush1.msra.mxu0 %v1430
  %1469 = vmatprep.subr.mxu0 0.0
  %1470 = vmatpush1.msra.mxu0 %v1431
  %1471 = vmatprep.subr.mxu0 0.0
  %1472 = vmatpush1.msra.mxu0 %v1432
  %1473 = vmatprep.subr.mxu0 0.0
  %1474 = vmatpush1.msra.mxu0 %v1433
  %1475 = vmatprep.subr.mxu0 0.0
  %1476 = vmatpush1.msra.mxu0 %v1434
  %1477 = vmatprep.subr.mxu0 0.0
  %1478 = vmatpush1.msra.mxu0 %v1435
  %1479 = vmatprep.subr.mxu0 0.0
  %1480 = vmatpush1.msra.mxu0 %v1436
  %1481 = vmatprep.subr.mxu0 0.0
  %1482 = vmatpush1.msra.mxu0 %v1437
  %1483 = vmatprep.subr.mxu0 0.0
  %1484 = vmatpush1.msra.mxu0 %v1438
  %1485 = vmatprep.subr.mxu0 0.0
  %1486 = vmatpush1.msra.mxu0 %v1439
  %1487 = vmatprep.subr.mxu0 0.0
  %1488 = vmatpush1.msra.mxu0 %v1440
  %1489 = vmatprep.subr.mxu0 0.0
  %1490 = vmatpush1.msra.mxu0 %v1441
  %1491 = vmatprep.subr.mxu0 0.0
  %1492 = vmatpush1.msra.mxu0 %v1442
  %1493 = vmatprep.subr.mxu0 0.0
  %1494 = vmatpush1.msra.mxu0 %v1443
  %1495 = vmatprep.subr.mxu0 0.0
  %1496 = vmatpush1.msra.mxu0 %v1444
  %1497 = vmatprep.subr.mxu0 0.0
  %1498 = vmatpush1.msra.mxu0 %v1445
  %1499 = vmatprep.subr.mxu0 0.0
  %1500 = vmatpush1.msra.mxu0 0.0
  %1501 = vmatprep.subr.mxu0 0.0
  %1502 = vmatpush1.msra.mxu0 0.0
  %1503 = vmatprep.subr.mxu0 0.0
  %1504 = vmatpush1.msra.mxu0 0.0
  %1505 = vmatprep.subr.mxu0 0.0
  %1506 = vmatpush1.msra.mxu0 0.0
  %1507 = vmatprep.subr.mxu0 0.0
  %1508 = vmatpush1.msra.mxu0 0.0
  %1509 = vmatprep.subr.mxu0 0.0
  %1510 = vmatpush1.msra.mxu0 0.0
  %1511 = vmatprep.subr.mxu0 0.0
  %1512 = vmatpush1.msra.mxu0 0.0
  %1513 = vmatprep.subr.mxu0 0.0
  %1514 = vmatpush1.msra.mxu0 0.0
  %1515 = vmatprep.subr.mxu0 0.0
  %1516 = vmatpush1.msra.mxu0 0.0
  %1517 = vmatprep.subr.mxu0 0.0
  %1518 = vmatpush1.msra.mxu0 0.0
  %1519 = vmatprep.subr.mxu0 0.0
  %1520 = vmatpush1.msra.mxu0 0.0
  %1521 = vmatprep.subr.mxu0 0.0
  %1522 = vmatpush1.msra.mxu0 0.0
  %1523 = vmatprep.subr.mxu0 0.0
  %1524 = vmatpush1.msra.mxu0 0.0
  %1525 = vmatprep.subr.mxu0 0.0
  %1526 = vmatpush1.msra.mxu0 0.0
  %1527 = vmatprep.subr.mxu0 0.0
  %1528 = vmatpush1.msra.mxu0 0.0
  %1529 = vmatprep.subr.mxu0 0.0
  %1530 = vmatpush1.msra.mxu0 0.0
  %1531 = vmatprep.mubr.f32.mxu0 0.0
  %1532 = vmatmul.mubr.f32.gmra.mrb[0].mxu0 %v399
  %v1533 = vpop.f32.mrb[0].mxu0
  %v1534 = vadd.f32 0.0, %v1533
  %v1535 = vpop.f32.mrb[0].mxu0
  %1536 = vmatprep.mubr.f32.mxu0 0.0
  %1537 = vmatmul.mubr.f32.gmra.mrb[0].mxu0 %v405
  %v1538 = vpop.f32.mrb[0].mxu0
  %v1539 = vadd.f32 0.0, %v1538
  %v1540 = vpop.f32.mrb[0].mxu0
  %1541 = vmatprep.mubr.f32.mxu0 0.0
  %1542 = vmatmul.mubr.f32.gmra.mrb[0].mxu0 %v411
  %v1543 = vpop.f32.mrb[0].mxu0
  %v1544 = vadd.f32 0.0, %v1543
  %v1545 = vpop.f32.mrb[0].mxu0
  %1546 = vmatprep.mubr.f32.mxu0 0.0
  %1547 = vmatmul.mubr.f32.gmra.mrb[0].mxu0 %v417
  %v1548 = vpop.f32.mrb[0].mxu0
  %v1549 = vadd.f32 0.0, %v1548
  %v1550 = vpop.f32.mrb[0].mxu0
  %1551 = vmatprep.mubr.f32.mxu0 0.0
  %1552 = vmatmul.mubr.f32.gmra.mrb[0].mxu0 %v423
  %v1553 = vpop.f32.mrb[0].mxu0
  %v1554 = vadd.f32 0.0, %v1553
  %v1555 = vpop.f32.mrb[0].mxu0
  %1556 = vmatprep.mubr.f32.mxu0 0.0
  %1557 = vmatmul.mubr.f32.gmra.mrb[0].mxu0 %v429
  %v1558 = vpop.f32.mrb[0].mxu0
  %v1559 = vadd.f32 0.0, %v1558
  %v1560 = vpop.f32.mrb[0].mxu0
  %1561 = vmatprep.mubr.f32.mxu0 0.0
  %1562 = vmatmul.mubr.f32.gmra.mrb[0].mxu0 %v435
  %v1563 = vpop.f32.mrb[0].mxu0
  %v1564 = vadd.f32 0.0, %v1563
  %v1565 = vpop.f32.mrb[0].mxu0
  %1566 = vmatprep.mubr.f32.mxu0 0.0
  %1567 = vmatmul.mubr.f32.gmra.mrb[0].mxu0 %v441
  %v1568 = vpop.f32.mrb[0].mxu0
  %v1569 = vadd.f32 0.0, %v1568
  %v1570 = vpop.f32.mrb[0].mxu0
  %1571 = vmatprep.mubr.f32.mxu0 0.0
  %1572 = vmatmul.mubr.f32.gmra.mrb[0].mxu0 %v447
  %v1573 = vpop.f32.mrb[0].mxu0
  %v1574 = vadd.f32 0.0, %v1573
  %v1575 = vpop.f32.mrb[0].mxu0
  %1576 = vmatprep.mubr.f32.mxu0 0.0
  %1577 = vmatmul.mubr.f32.gmra.mrb[0].mxu0 %v453
  %v1578 = vpop.f32.mrb[0].mxu0
  %v1579 = vadd.f32 0.0, %v1578
  %v1580 = vpop.f32.mrb[0].mxu0
  %1581 = vmatprep.mubr.f32.mxu0 0.0
  %1582 = vmatmul.mubr.f32.gmra.mrb[0].mxu0 %v459
  %v1583 = vpop.f32.mrb[0].mxu0
  %v1584 = vadd.f32 0.0, %v1583
  %v1585 = vpop.f32.mrb[0].mxu0
  %1586 = vmatprep.mubr.f32.mxu0 0.0
  %1587 = vmatmul.mubr.f32.gmra.mrb[0].mxu0 %v465
  %v1588 = vpop.f32.mrb[0].mxu0
  %v1589 = vadd.f32 0.0, %v1588
  %v1590 = vpop.f32.mrb[0].mxu0
  %1591 = vmatprep.mubr.f32.mxu0 0.0
  %1592 = vmatmul.mubr.f32.gmra.mrb[0].mxu0 %v471
  %v1593 = vpop.f32.mrb[0].mxu0
  %v1594 = vadd.f32 0.0, %v1593
  %v1595 = vpop.f32.mrb[0].mxu0
  %1596 = vmatprep.mubr.f32.mxu0 0.0
  %1597 = vmatmul.mubr.f32.gmra.mrb[0].mxu0 %v477
  %v1598 = vpop.f32.mrb[0].mxu0
  %v1599 = vadd.f32 0.0, %v1598
  %v1600 = vpop.f32.mrb[0].mxu0
  %1601 = vmatprep.mubr.f32.mxu0 0.0
  %1602 = vmatmul.mubr.f32.gmra.mrb[0].mxu0 %v483
  %v1603 = vpop.f32.mrb[0].mxu0
  %v1604 = vadd.f32 0.0, %v1603
  %v1605 = vpop.f32.mrb[0].mxu0
  %1606 = vmatprep.mubr.f32.mxu0 0.0
  %1607 = vmatmul.mubr.f32.gmra.mrb[0].mxu0 %v489
  %v1608 = vpop.f32.mrb[0].mxu0
  %v1609 = vadd.f32 0.0, %v1608
  %v1610 = vpop.f32.mrb[0].mxu0
  %1611 = vdwg.mxu0
  %v1612 = vadd.f32 %v1466, 1e-09
  %v1613 = vrcp.pop %v1612
  %v1614 = vmul.f32 %v1534, %v1613
  %v1615 = vmul.f32 %v1539, %v1613
  %v1616 = vmul.f32 %v1544, %v1613
  %v1617 = vmul.f32 %v1549, %v1613
  %v1618 = vmul.f32 %v1554, %v1613
  %v1619 = vmul.f32 %v1559, %v1613
  %v1620 = vmul.f32 %v1564, %v1613
  %v1621 = vmul.f32 %v1569, %v1613
  %v1622 = vmul.f32 %v1574, %v1613
  %v1623 = vmul.f32 %v1579, %v1613
  %v1624 = vmul.f32 %v1584, %v1613
  %v1625 = vmul.f32 %v1589, %v1613
  %v1626 = vmul.f32 %v1594, %v1613
  %v1627 = vmul.f32 %v1599, %v1613
  %v1628 = vmul.f32 %v1604, %v1613
  %v1629 = vmul.f32 %v1609, %v1613
  %v1630 = vsub.f32 %v30, %v1614
  %v1631 = vsub.f32 %v32, %v1615
  %v1632 = vsub.f32 %v34, %v1616
  %v1633 = vsub.f32 %v36, %v1617
  %v1634 = vsub.f32 %v38, %v1618
  %v1635 = vsub.f32 %v40, %v1619
  %v1636 = vsub.f32 %v42, %v1620
  %v1637 = vsub.f32 %v44, %v1621
  %v1638 = vsub.f32 %v46, %v1622
  %v1639 = vsub.f32 %v48, %v1623
  %v1640 = vsub.f32 %v50, %v1624
  %v1641 = vsub.f32 %v52, %v1625
  %v1642 = vsub.f32 %v54, %v1626
  %v1643 = vsub.f32 %v56, %v1627
  %v1644 = vsub.f32 %v58, %v1628
  %v1645 = vsub.f32 %v60, %v1629
  %1646 = vst [vmem:[#allocation2 + $0x8] sm:$0xff] %v1630
  %1647 = vst [vmem:[#allocation2 + $0x18] sm:$0xff] %v1631
  %1648 = vst [vmem:[#allocation2 + $0x28] sm:$0xff] %v1632
  %1649 = vst [vmem:[#allocation2 + $0x38] sm:$0xff] %v1633
  %1650 = vst [vmem:[#allocation2 + $0x48] sm:$0xff] %v1634
  %1651 = vst [vmem:[#allocation2 + $0x58] sm:$0xff] %v1635
  %1652 = vst [vmem:[#allocation2 + $0x68] sm:$0xff] %v1636
  %1653 = vst [vmem:[#allocation2 + $0x78] sm:$0xff] %v1637
  %1654 = vst [vmem:[#allocation2 + $0x88] sm:$0xff] %v1638
  %1655 = vst [vmem:[#allocation2 + $0x98] sm:$0xff] %v1639
  %1656 = vst [vmem:[#allocation2 + $0xa8] sm:$0xff] %v1640
  %1657 = vst [vmem:[#allocation2 + $0xb8] sm:$0xff] %v1641
  %1658 = vst [vmem:[#allocation2 + $0xc8] sm:$0xff] %v1642
  %1659 = vst [vmem:[#allocation2 + $0xd8] sm:$0xff] %v1643
  %1660 = vst [vmem:[#allocation2 + $0xe8] sm:$0xff] %v1644
  %1661 = vst [vmem:[#allocation2 + $0xf8] sm:$0xff] %v1645
  %v1662 = vld [vmem:[#allocation2] sm:$0xff]
  %v1663 = vld [vmem:[#allocation2 + $0x8] sm:$0xff]
  %v1664 = vld [vmem:[#allocation2 + $0x10] sm:$0xff]
  %v1665 = vld [vmem:[#allocation2 + $0x18] sm:$0xff]
  %v1666 = vld [vmem:[#allocation2 + $0x20] sm:$0xff]
  %v1667 = vld [vmem:[#allocation2 + $0x28] sm:$0xff]
  %v1668 = vld [vmem:[#allocation2 + $0x30] sm:$0xff]
  %v1669 = vld [vmem:[#allocation2 + $0x38] sm:$0xff]
  %v1670 = vld [vmem:[#allocation2 + $0x40] sm:$0xff]
  %v1671 = vld [vmem:[#allocation2 + $0x48] sm:$0xff]
  %v1672 = vld [vmem:[#allocation2 + $0x50] sm:$0xff]
  %v1673 = vld [vmem:[#allocation2 + $0x58] sm:$0xff]
  %v1674 = vld [vmem:[#allocation2 + $0x60] sm:$0xff]
  %v1675 = vld [vmem:[#allocation2 + $0x68] sm:$0xff]
  %v1676 = vld [vmem:[#allocation2 + $0x70] sm:$0xff]
  %v1677 = vld [vmem:[#allocation2 + $0x78] sm:$0xff]
  %v1678 = vld [vmem:[#allocation2 + $0x80] sm:$0xff]
  %v1679 = vld [vmem:[#allocation2 + $0x88] sm:$0xff]
  %v1680 = vld [vmem:[#allocation2 + $0x90] sm:$0xff]
  %v1681 = vld [vmem:[#allocation2 + $0x98] sm:$0xff]
  %v1682 = vld [vmem:[#allocation2 + $0xa0] sm:$0xff]
  %v1683 = vld [vmem:[#allocation2 + $0xa8] sm:$0xff]
  %v1684 = vld [vmem:[#allocation2 + $0xb0] sm:$0xff]
  %v1685 = vld [vmem:[#allocation2 + $0xb8] sm:$0xff]
  %v1686 = vld [vmem:[#allocation2 + $0xc0] sm:$0xff]
  %v1687 = vld [vmem:[#allocation2 + $0xc8] sm:$0xff]
  %v1688 = vld [vmem:[#allocation2 + $0xd0] sm:$0xff]
  %v1689 = vld [vmem:[#allocation2 + $0xd8] sm:$0xff]
  %v1690 = vld [vmem:[#allocation2 + $0xe0] sm:$0xff]
  %v1691 = vld [vmem:[#allocation2 + $0xe8] sm:$0xff]
  %v1692 = vld [vmem:[#allocation2 + $0xf0] sm:$0xff]
  %v1693 = vld [vmem:[#allocation2 + $0xf8] sm:$0xff]
  %1695 = vset.pattern.permute.xlu0 0
  %1696 = vperm.xlu0 %1695, %v113
  %v1697 = vpop.permute.xlu0 %1696
  %1700 = vset.pattern.permute.xlu0 0
  %1701 = vperm.xlu0 %1700, %v114
  %v1702 = vpop.permute.xlu0 %1701
  %1705 = vset.pattern.permute.xlu0 0
  %1706 = vperm.xlu0 %1705, %v115
  %v1707 = vpop.permute.xlu0 %1706
  %1710 = vset.pattern.permute.xlu0 0
  %1711 = vperm.xlu0 %1710, %v116
  %v1712 = vpop.permute.xlu0 %1711
  %1715 = vset.pattern.permute.xlu0 0
  %1716 = vperm.xlu0 %1715, %v117
  %v1717 = vpop.permute.xlu0 %1716
  %1720 = vset.pattern.permute.xlu0 0
  %1721 = vperm.xlu0 %1720, %v118
  %v1722 = vpop.permute.xlu0 %1721
  %1725 = vset.pattern.permute.xlu0 0
  %1726 = vperm.xlu0 %1725, %v119
  %v1727 = vpop.permute.xlu0 %1726
  %1730 = vset.pattern.permute.xlu0 0
  %1731 = vperm.xlu0 %1730, %v120
  %v1732 = vpop.permute.xlu0 %1731
  %1735 = vset.pattern.permute.xlu0 0
  %1736 = vperm.xlu0 %1735, %v121
  %v1737 = vpop.permute.xlu0 %1736
  %1740 = vset.pattern.permute.xlu0 0
  %1741 = vperm.xlu0 %1740, %v122
  %v1742 = vpop.permute.xlu0 %1741
  %1745 = vset.pattern.permute.xlu0 0
  %1746 = vperm.xlu0 %1745, %v123
  %v1747 = vpop.permute.xlu0 %1746
  %1750 = vset.pattern.permute.xlu0 0
  %1751 = vperm.xlu0 %1750, %v124
  %v1752 = vpop.permute.xlu0 %1751
  %1755 = vset.pattern.permute.xlu0 0
  %1756 = vperm.xlu0 %1755, %v125
  %v1757 = vpop.permute.xlu0 %1756
  %1760 = vset.pattern.permute.xlu0 0
  %1761 = vperm.xlu0 %1760, %v126
  %v1762 = vpop.permute.xlu0 %1761
  %1765 = vset.pattern.permute.xlu0 0
  %1766 = vperm.xlu0 %1765, %v127
  %v1767 = vpop.permute.xlu0 %1766
  %1770 = vset.pattern.permute.xlu0 0
  %1771 = vperm.xlu0 %1770, %v128
  %v1772 = vpop.permute.xlu0 %1771
  %1774 = vmatprep.subr.mxu0 %v1663
  %1775 = vmatpush1.msra.mxu0 %v1662
  %1776 = vmatprep.subr.mxu0 %v1665
  %1777 = vmatpush1.msra.mxu0 %v1664
  %1778 = vmatprep.subr.mxu0 %v1667
  %1779 = vmatpush1.msra.mxu0 %v1666
  %1780 = vmatprep.subr.mxu0 %v1669
  %1781 = vmatpush1.msra.mxu0 %v1668
  %1782 = vmatprep.subr.mxu0 %v1671
  %1783 = vmatpush1.msra.mxu0 %v1670
  %1784 = vmatprep.subr.mxu0 %v1673
  %1785 = vmatpush1.msra.mxu0 %v1672
  %1786 = vmatprep.subr.mxu0 %v1675
  %1787 = vmatpush1.msra.mxu0 %v1674
  %1788 = vmatprep.subr.mxu0 %v1677
  %1789 = vmatpush1.msra.mxu0 %v1676
  %1790 = vmatprep.subr.mxu0 %v1679
  %1791 = vmatpush1.msra.mxu0 %v1678
  %1792 = vmatprep.subr.mxu0 %v1681
  %1793 = vmatpush1.msra.mxu0 %v1680
  %1794 = vmatprep.subr.mxu0 %v1683
  %1795 = vmatpush1.msra.mxu0 %v1682
  %1796 = vmatprep.subr.mxu0 %v1685
  %1797 = vmatpush1.msra.mxu0 %v1684
  %1798 = vmatprep.subr.mxu0 %v1687
  %1799 = vmatpush1.msra.mxu0 %v1686
  %1800 = vmatprep.subr.mxu0 %v1689
  %1801 = vmatpush1.msra.mxu0 %v1688
  %1802 = vmatprep.subr.mxu0 %v1691
  %1803 = vmatpush1.msra.mxu0 %v1690
  %1804 = vmatprep.subr.mxu0 %v1693
  %1805 = vmatpush1.msra.mxu0 %v1692
  %1806 = vmatprep.subr.mxu0 0.0
  %1807 = vmatpush1.msra.mxu0 0.0
  %1808 = vmatprep.subr.mxu0 0.0
  %1809 = vmatpush1.msra.mxu0 0.0
  %1810 = vmatprep.subr.mxu0 0.0
  %1811 = vmatpush1.msra.mxu0 0.0
  %1812 = vmatprep.subr.mxu0 0.0
  %1813 = vmatpush1.msra.mxu0 0.0
  %1814 = vmatprep.subr.mxu0 0.0
  %1815 = vmatpush1.msra.mxu0 0.0
  %1816 = vmatprep.subr.mxu0 0.0
  %1817 = vmatpush1.msra.mxu0 0.0
  %1818 = vmatprep.subr.mxu0 0.0
  %1819 = vmatpush1.msra.mxu0 0.0
  %1820 = vmatprep.subr.mxu0 0.0
  %1821 = vmatpush1.msra.mxu0 0.0
  %1822 = vmatprep.subr.mxu0 0.0
  %1823 = vmatpush1.msra.mxu0 0.0
  %1824 = vmatprep.subr.mxu0 0.0
  %1825 = vmatpush1.msra.mxu0 0.0
  %1826 = vmatprep.subr.mxu0 0.0
  %1827 = vmatpush1.msra.mxu0 0.0
  %1828 = vmatprep.subr.mxu0 0.0
  %1829 = vmatpush1.msra.mxu0 0.0
  %1830 = vmatprep.subr.mxu0 0.0
  %1831 = vmatpush1.msra.mxu0 0.0
  %1832 = vmatprep.subr.mxu0 0.0
  %1833 = vmatpush1.msra.mxu0 0.0
  %1834 = vmatprep.subr.mxu0 0.0
  %1835 = vmatpush1.msra.mxu0 0.0
  %1836 = vmatprep.subr.mxu0 0.0
  %1837 = vmatpush1.msra.mxu0 0.0
  %1838 = vmatprep.mubr.f32.mxu0 0.0
  %1839 = vmatmul.mubr.f32.gmra.mrb[0].mxu0 %v97
  %v1840 = vpop.f32.mrb[0].mxu0
  %v1841 = vadd.f32 %v1697, %v1840
  %v1842 = vpop.f32.mrb[0].mxu0
  %v1843 = vadd.f32 %v1697, %v1842
  %1844 = vmatprep.mubr.f32.mxu0 0.0
  %1845 = vmatmul.mubr.f32.gmra.mrb[0].mxu0 %v98
  %v1846 = vpop.f32.mrb[0].mxu0
  %v1847 = vadd.f32 %v1702, %v1846
  %v1848 = vpop.f32.mrb[0].mxu0
  %v1849 = vadd.f32 %v1702, %v1848
  %1850 = vmatprep.mubr.f32.mxu0 0.0
  %1851 = vmatmul.mubr.f32.gmra.mrb[0].mxu0 %v99
  %v1852 = vpop.f32.mrb[0].mxu0
  %v1853 = vadd.f32 %v1707, %v1852
  %v1854 = vpop.f32.mrb[0].mxu0
  %v1855 = vadd.f32 %v1707, %v1854
  %1856 = vmatprep.mubr.f32.mxu0 0.0
  %1857 = vmatmul.mubr.f32.gmra.mrb[0].mxu0 %v100
  %v1858 = vpop.f32.mrb[0].mxu0
  %v1859 = vadd.f32 %v1712, %v1858
  %v1860 = vpop.f32.mrb[0].mxu0
  %v1861 = vadd.f32 %v1712, %v1860
  %1862 = vmatprep.mubr.f32.mxu0 0.0
  %1863 = vmatmul.mubr.f32.gmra.mrb[0].mxu0 %v101
  %v1864 = vpop.f32.mrb[0].mxu0
  %v1865 = vadd.f32 %v1717, %v1864
  %v1866 = vpop.f32.mrb[0].mxu0
  %v1867 = vadd.f32 %v1717, %v1866
  %1868 = vmatprep.mubr.f32.mxu0 0.0
  %1869 = vmatmul.mubr.f32.gmra.mrb[0].mxu0 %v102
  %v1870 = vpop.f32.mrb[0].mxu0
  %v1871 = vadd.f32 %v1722, %v1870
  %v1872 = vpop.f32.mrb[0].mxu0
  %v1873 = vadd.f32 %v1722, %v1872
  %1874 = vmatprep.mubr.f32.mxu0 0.0
  %1875 = vmatmul.mubr.f32.gmra.mrb[0].mxu0 %v103
  %v1876 = vpop.f32.mrb[0].mxu0
  %v1877 = vadd.f32 %v1727, %v1876
  %v1878 = vpop.f32.mrb[0].mxu0
  %v1879 = vadd.f32 %v1727, %v1878
  %1880 = vmatprep.mubr.f32.mxu0 0.0
  %1881 = vmatmul.mubr.f32.gmra.mrb[0].mxu0 %v104
  %v1882 = vpop.f32.mrb[0].mxu0
  %v1883 = vadd.f32 %v1732, %v1882
  %v1884 = vpop.f32.mrb[0].mxu0
  %v1885 = vadd.f32 %v1732, %v1884
  %1886 = vmatprep.mubr.f32.mxu0 0.0
  %1887 = vmatmul.mubr.f32.gmra.mrb[0].mxu0 %v105
  %v1888 = vpop.f32.mrb[0].mxu0
  %v1889 = vadd.f32 %v1737, %v1888
  %v1890 = vpop.f32.mrb[0].mxu0
  %v1891 = vadd.f32 %v1737, %v1890
  %1892 = vmatprep.mubr.f32.mxu0 0.0
  %1893 = vmatmul.mubr.f32.gmra.mrb[0].mxu0 %v106
  %v1894 = vpop.f32.mrb[0].mxu0
  %v1895 = vadd.f32 %v1742, %v1894
  %v1896 = vpop.f32.mrb[0].mxu0
  %v1897 = vadd.f32 %v1742, %v1896
  %1898 = vmatprep.mubr.f32.mxu0 0.0
  %1899 = vmatmul.mubr.f32.gmra.mrb[0].mxu0 %v107
  %v1900 = vpop.f32.mrb[0].mxu0
  %v1901 = vadd.f32 %v1747, %v1900
  %v1902 = vpop.f32.mrb[0].mxu0
  %v1903 = vadd.f32 %v1747, %v1902
  %1904 = vmatprep.mubr.f32.mxu0 0.0
  %1905 = vmatmul.mubr.f32.gmra.mrb[0].mxu0 %v108
  %v1906 = vpop.f32.mrb[0].mxu0
  %v1907 = vadd.f32 %v1752, %v1906
  %v1908 = vpop.f32.mrb[0].mxu0
  %v1909 = vadd.f32 %v1752, %v1908
  %1910 = vmatprep.mubr.f32.mxu0 0.0
  %1911 = vmatmul.mubr.f32.gmra.mrb[0].mxu0 %v109
  %v1912 = vpop.f32.mrb[0].mxu0
  %v1913 = vadd.f32 %v1757, %v1912
  %v1914 = vpop.f32.mrb[0].mxu0
  %v1915 = vadd.f32 %v1757, %v1914
  %1916 = vmatprep.mubr.f32.mxu0 0.0
  %1917 = vmatmul.mubr.f32.gmra.mrb[0].mxu0 %v110
  %v1918 = vpop.f32.mrb[0].mxu0
  %v1919 = vadd.f32 %v1762, %v1918
  %v1920 = vpop.f32.mrb[0].mxu0
  %v1921 = vadd.f32 %v1762, %v1920
  %1922 = vmatprep.mubr.f32.mxu0 0.0
  %1923 = vmatmul.mubr.f32.gmra.mrb[0].mxu0 %v111
  %v1924 = vpop.f32.mrb[0].mxu0
  %v1925 = vadd.f32 %v1767, %v1924
  %v1926 = vpop.f32.mrb[0].mxu0
  %v1927 = vadd.f32 %v1767, %v1926
  %1928 = vmatprep.mubr.f32.mxu0 0.0
  %1929 = vmatmul.mubr.f32.gmra.mrb[0].mxu0 %v112
  %v1930 = vpop.f32.mrb[0].mxu0
  %v1931 = vadd.f32 %v1772, %v1930
  %v1932 = vpop.f32.mrb[0].mxu0
  %v1933 = vadd.f32 %v1772, %v1932
  %1934 = vdwg.mxu0
  %v1935 = vadd.f32 %v1841, %v1843
  %1936 = vadd.xlane.f32.xlu0 %v1935
  %v1937 = vpop.xlane.xlu0 %1936
  %v1938 = vadd.f32 %v1847, %v1849
  %1939 = vadd.xlane.f32.xlu0 %v1938
  %v1940 = vpop.xlane.xlu0 %1939
  %v1941 = vadd.f32 %v1853, %v1855
  %1942 = vadd.xlane.f32.xlu0 %v1941
  %v1943 = vpop.xlane.xlu0 %1942
  %v1944 = vadd.f32 %v1859, %v1861
  %1945 = vadd.xlane.f32.xlu0 %v1944
  %v1946 = vpop.xlane.xlu0 %1945
  %v1947 = vadd.f32 %v1865, %v1867
  %1948 = vadd.xlane.f32.xlu0 %v1947
  %v1949 = vpop.xlane.xlu0 %1948
  %v1950 = vadd.f32 %v1871, %v1873
  %1951 = vadd.xlane.f32.xlu0 %v1950
  %v1952 = vpop.xlane.xlu0 %1951
  %v1953 = vadd.f32 %v1877, %v1879
  %1954 = vadd.xlane.f32.xlu0 %v1953
  %v1955 = vpop.xlane.xlu0 %1954
  %v1956 = vadd.f32 %v1883, %v1885
  %1957 = vadd.xlane.f32.xlu0 %v1956
  %v1958 = vpop.xlane.xlu0 %1957
  %v1959 = vadd.f32 %v1889, %v1891
  %1960 = vadd.xlane.f32.xlu0 %v1959
  %v1961 = vpop.xlane.xlu0 %1960
  %v1962 = vadd.f32 %v1895, %v1897
  %1963 = vadd.xlane.f32.xlu0 %v1962
  %v1964 = vpop.xlane.xlu0 %1963
  %v1965 = vadd.f32 %v1901, %v1903
  %1966 = vadd.xlane.f32.xlu0 %v1965
  %v1967 = vpop.xlane.xlu0 %1966
  %v1968 = vadd.f32 %v1907, %v1909
  %1969 = vadd.xlane.f32.xlu0 %v1968
  %v1970 = vpop.xlane.xlu0 %1969
  %v1971 = vadd.f32 %v1913, %v1915
  %1972 = vadd.xlane.f32.xlu0 %v1971
  %v1973 = vpop.xlane.xlu0 %1972
  %v1974 = vadd.f32 %v1919, %v1921
  %1975 = vadd.xlane.f32.xlu0 %v1974
  %v1976 = vpop.xlane.xlu0 %1975
  %v1977 = vadd.f32 %v1925, %v1927
  %1978 = vadd.xlane.f32.xlu0 %v1977
  %v1979 = vpop.xlane.xlu0 %1978
  %v1980 = vadd.f32 %v1931, %v1933
  %1981 = vadd.xlane.f32.xlu0 %v1980
  %v1982 = vpop.xlane.xlu0 %1981
  %v1983 = vrcp.pop 256.0
  %v1984 = vmul.f32 %v1937, %v1983
  %v1985 = vmul.f32 %v1940, %v1983
  %v1986 = vmul.f32 %v1943, %v1983
  %v1987 = vmul.f32 %v1946, %v1983
  %v1988 = vmul.f32 %v1949, %v1983
  %v1989 = vmul.f32 %v1952, %v1983
  %v1990 = vmul.f32 %v1955, %v1983
  %v1991 = vmul.f32 %v1958, %v1983
  %v1992 = vmul.f32 %v1961, %v1983
  %v1993 = vmul.f32 %v1964, %v1983
  %v1994 = vmul.f32 %v1967, %v1983
  %v1995 = vmul.f32 %v1970, %v1983
  %v1996 = vmul.f32 %v1973, %v1983
  %v1997 = vmul.f32 %v1976, %v1983
  %v1998 = vmul.f32 %v1979, %v1983
  %v1999 = vmul.f32 %v1982, %v1983
  %v2000 = vmul.f32 %v1841, %v1841
  %v2001 = vmul.f32 %v1843, %v1843
  %v2002 = vmul.f32 %v1847, %v1847
  %v2003 = vmul.f32 %v1849, %v1849
  %v2004 = vmul.f32 %v1853, %v1853
  %v2005 = vmul.f32 %v1855, %v1855
  %v2006 = vmul.f32 %v1859, %v1859
  %v2007 = vmul.f32 %v1861, %v1861
  %v2008 = vmul.f32 %v1865, %v1865
  %v2009 = vmul.f32 %v1867, %v1867
  %v2010 = vmul.f32 %v1871, %v1871
  %v2011 = vmul.f32 %v1873, %v1873
  %v2012 = vmul.f32 %v1877, %v1877
  %v2013 = vmul.f32 %v1879, %v1879
  %v2014 = vmul.f32 %v1883, %v1883
  %v2015 = vmul.f32 %v1885, %v1885
  %v2016 = vmul.f32 %v1889, %v1889
  %v2017 = vmul.f32 %v1891, %v1891
  %v2018 = vmul.f32 %v1895, %v1895
  %v2019 = vmul.f32 %v1897, %v1897
  %v2020 = vmul.f32 %v1901, %v1901
  %v2021 = vmul.f32 %v1903, %v1903
  %v2022 = vmul.f32 %v1907, %v1907
  %v2023 = vmul.f32 %v1909, %v1909
  %v2024 = vmul.f32 %v1913, %v1913
  %v2025 = vmul.f32 %v1915, %v1915
  %v2026 = vmul.f32 %v1919, %v1919
  %v2027 = vmul.f32 %v1921, %v1921
  %v2028 = vmul.f32 %v1925, %v1925
  %v2029 = vmul.f32 %v1927, %v1927
  %v2030 = vmul.f32 %v1931, %v1931
  %v2031 = vmul.f32 %v1933, %v1933
  %v2032 = vadd.f32 %v2000, %v2001
  %2033 = vadd.xlane.f32.xlu0 %v2032
  %v2034 = vpop.xlane.xlu0 %2033
  %v2035 = vadd.f32 %v2002, %v2003
  %2036 = vadd.xlane.f32.xlu0 %v2035
  %v2037 = vpop.xlane.xlu0 %2036
  %v2038 = vadd.f32 %v2004, %v2005
  %2039 = vadd.xlane.f32.xlu0 %v2038
  %v2040 = vpop.xlane.xlu0 %2039
  %v2041 = vadd.f32 %v2006, %v2007
  %2042 = vadd.xlane.f32.xlu0 %v2041
  %v2043 = vpop.xlane.xlu0 %2042
  %v2044 = vadd.f32 %v2008, %v2009
  %2045 = vadd.xlane.f32.xlu0 %v2044
  %v2046 = vpop.xlane.xlu0 %2045
  %v2047 = vadd.f32 %v2010, %v2011
  %2048 = vadd.xlane.f32.xlu0 %v2047
  %v2049 = vpop.xlane.xlu0 %2048
  %v2050 = vadd.f32 %v2012, %v2013
  %2051 = vadd.xlane.f32.xlu0 %v2050
  %v2052 = vpop.xlane.xlu0 %2051
  %v2053 = vadd.f32 %v2014, %v2015
  %2054 = vadd.xlane.f32.xlu0 %v2053
  %v2055 = vpop.xlane.xlu0 %2054
  %v2056 = vadd.f32 %v2016, %v2017
  %2057 = vadd.xlane.f32.xlu0 %v2056
  %v2058 = vpop.xlane.xlu0 %2057
  %v2059 = vadd.f32 %v2018, %v2019
  %2060 = vadd.xlane.f32.xlu0 %v2059
  %v2061 = vpop.xlane.xlu0 %2060
  %v2062 = vadd.f32 %v2020, %v2021
  %2063 = vadd.xlane.f32.xlu0 %v2062
  %v2064 = vpop.xlane.xlu0 %2063
  %v2065 = vadd.f32 %v2022, %v2023
  %2066 = vadd.xlane.f32.xlu0 %v2065
  %v2067 = vpop.xlane.xlu0 %2066
  %v2068 = vadd.f32 %v2024, %v2025
  %2069 = vadd.xlane.f32.xlu0 %v2068
  %v2070 = vpop.xlane.xlu0 %2069
  %v2071 = vadd.f32 %v2026, %v2027
  %2072 = vadd.xlane.f32.xlu0 %v2071
  %v2073 = vpop.xlane.xlu0 %2072
  %v2074 = vadd.f32 %v2028, %v2029
  %2075 = vadd.xlane.f32.xlu0 %v2074
  %v2076 = vpop.xlane.xlu0 %2075
  %v2077 = vadd.f32 %v2030, %v2031
  %2078 = vadd.xlane.f32.xlu0 %v2077
  %v2079 = vpop.xlane.xlu0 %2078
  %v2080 = vmul.f32 %v2034, %v1983
  %v2081 = vmul.f32 %v2037, %v1983
  %v2082 = vmul.f32 %v2040, %v1983
  %v2083 = vmul.f32 %v2043, %v1983
  %v2084 = vmul.f32 %v2046, %v1983
  %v2085 = vmul.f32 %v2049, %v1983
  %v2086 = vmul.f32 %v2052, %v1983
  %v2087 = vmul.f32 %v2055, %v1983
  %v2088 = vmul.f32 %v2058, %v1983
  %v2089 = vmul.f32 %v2061, %v1983
  %v2090 = vmul.f32 %v2064, %v1983
  %v2091 = vmul.f32 %v2067, %v1983
  %v2092 = vmul.f32 %v2070, %v1983
  %v2093 = vmul.f32 %v2073, %v1983
  %v2094 = vmul.f32 %v2076, %v1983
  %v2095 = vmul.f32 %v2079, %v1983
  %v2096 = vmul.f32 %v1984, %v1984
  %v2097 = vmul.f32 %v1985, %v1985
  %v2098 = vmul.f32 %v1986, %v1986
  %v2099 = vmul.f32 %v1987, %v1987
  %v2100 = vmul.f32 %v1988, %v1988
  %v2101 = vmul.f32 %v1989, %v1989
  %v2102 = vmul.f32 %v1990, %v1990
  %v2103 = vmul.f32 %v1991, %v1991
  %v2104 = vmul.f32 %v1992, %v1992
  %v2105 = vmul.f32 %v1993, %v1993
  %v2106 = vmul.f32 %v1994, %v1994
  %v2107 = vmul.f32 %v1995, %v1995
  %v2108 = vmul.f32 %v1996, %v1996
  %v2109 = vmul.f32 %v1997, %v1997
  %v2110 = vmul.f32 %v1998, %v1998
  %v2111 = vmul.f32 %v1999, %v1999
  %v2112 = vsub.f32 %v2080, %v2096
  %v2113 = vsub.f32 %v2081, %v2097
  %v2114 = vsub.f32 %v2082, %v2098
  %v2115 = vsub.f32 %v2083, %v2099
  %v2116 = vsub.f32 %v2084, %v2100
  %v2117 = vsub.f32 %v2085, %v2101
  %v2118 = vsub.f32 %v2086, %v2102
  %v2119 = vsub.f32 %v2087, %v2103
  %v2120 = vsub.f32 %v2088, %v2104
  %v2121 = vsub.f32 %v2089, %v2105
  %v2122 = vsub.f32 %v2090, %v2106
  %v2123 = vsub.f32 %v2091, %v2107
  %v2124 = vsub.f32 %v2092, %v2108
  %v2125 = vsub.f32 %v2093, %v2109
  %v2126 = vsub.f32 %v2094, %v2110
  %v2127 = vsub.f32 %v2095, %v2111
  %v2128 = vadd.f32 %v2112, 1e-05
  %v2129 = vadd.f32 %v2113, 1e-05
  %v2130 = vadd.f32 %v2114, 1e-05
  %v2131 = vadd.f32 %v2115, 1e-05
  %v2132 = vadd.f32 %v2116, 1e-05
  %v2133 = vadd.f32 %v2117, 1e-05
  %v2134 = vadd.f32 %v2118, 1e-05
  %v2135 = vadd.f32 %v2119, 1e-05
  %v2136 = vadd.f32 %v2120, 1e-05
  %v2137 = vadd.f32 %v2121, 1e-05
  %v2138 = vadd.f32 %v2122, 1e-05
  %v2139 = vadd.f32 %v2123, 1e-05
  %v2140 = vadd.f32 %v2124, 1e-05
  %v2141 = vadd.f32 %v2125, 1e-05
  %v2142 = vadd.f32 %v2126, 1e-05
  %v2143 = vadd.f32 %v2127, 1e-05
  %v2144 = vrsqrt.pop %v2128
  %v2145 = vrsqrt.pop %v2129
  %v2146 = vrsqrt.pop %v2130
  %v2147 = vrsqrt.pop %v2131
  %v2148 = vrsqrt.pop %v2132
  %v2149 = vrsqrt.pop %v2133
  %v2150 = vrsqrt.pop %v2134
  %v2151 = vrsqrt.pop %v2135
  %v2152 = vrsqrt.pop %v2136
  %v2153 = vrsqrt.pop %v2137
  %v2154 = vrsqrt.pop %v2138
  %v2155 = vrsqrt.pop %v2139
  %v2156 = vrsqrt.pop %v2140
  %v2157 = vrsqrt.pop %v2141
  %v2158 = vrsqrt.pop %v2142
  %v2159 = vrsqrt.pop %v2143
  %v2160 = vsub.f32 %v1841, %v1984
  %v2161 = vsub.f32 %v1843, %v1984
  %v2162 = vsub.f32 %v1847, %v1985
  %v2163 = vsub.f32 %v1849, %v1985
  %v2164 = vsub.f32 %v1853, %v1986
  %v2165 = vsub.f32 %v1855, %v1986
  %v2166 = vsub.f32 %v1859, %v1987
  %v2167 = vsub.f32 %v1861, %v1987
  %v2168 = vsub.f32 %v1865, %v1988
  %v2169 = vsub.f32 %v1867, %v1988
  %v2170 = vsub.f32 %v1871, %v1989
  %v2171 = vsub.f32 %v1873, %v1989
  %v2172 = vsub.f32 %v1877, %v1990
  %v2173 = vsub.f32 %v1879, %v1990
  %v2174 = vsub.f32 %v1883, %v1991
  %v2175 = vsub.f32 %v1885, %v1991
  %v2176 = vsub.f32 %v1889, %v1992
  %v2177 = vsub.f32 %v1891, %v1992
  %v2178 = vsub.f32 %v1895, %v1993
  %v2179 = vsub.f32 %v1897, %v1993
  %v2180 = vsub.f32 %v1901, %v1994
  %v2181 = vsub.f32 %v1903, %v1994
  %v2182 = vsub.f32 %v1907, %v1995
  %v2183 = vsub.f32 %v1909, %v1995
  %v2184 = vsub.f32 %v1913, %v1996
  %v2185 = vsub.f32 %v1915, %v1996
  %v2186 = vsub.f32 %v1919, %v1997
  %v2187 = vsub.f32 %v1921, %v1997
  %v2188 = vsub.f32 %v1925, %v1998
  %v2189 = vsub.f32 %v1927, %v1998
  %v2190 = vsub.f32 %v1931, %v1999
  %v2191 = vsub.f32 %v1933, %v1999
  %v2192 = vmul.f32 %v2160, %v2144
  %v2193 = vmul.f32 %v2161, %v2144
  %v2194 = vmul.f32 %v2162, %v2145
  %v2195 = vmul.f32 %v2163, %v2145
  %v2196 = vmul.f32 %v2164, %v2146
  %v2197 = vmul.f32 %v2165, %v2146
  %v2198 = vmul.f32 %v2166, %v2147
  %v2199 = vmul.f32 %v2167, %v2147
  %v2200 = vmul.f32 %v2168, %v2148
  %v2201 = vmul.f32 %v2169, %v2148
  %v2202 = vmul.f32 %v2170, %v2149
  %v2203 = vmul.f32 %v2171, %v2149
  %v2204 = vmul.f32 %v2172, %v2150
  %v2205 = vmul.f32 %v2173, %v2150
  %v2206 = vmul.f32 %v2174, %v2151
  %v2207 = vmul.f32 %v2175, %v2151
  %v2208 = vmul.f32 %v2176, %v2152
  %v2209 = vmul.f32 %v2177, %v2152
  %v2210 = vmul.f32 %v2178, %v2153
  %v2211 = vmul.f32 %v2179, %v2153
  %v2212 = vmul.f32 %v2180, %v2154
  %v2213 = vmul.f32 %v2181, %v2154
  %v2214 = vmul.f32 %v2182, %v2155
  %v2215 = vmul.f32 %v2183, %v2155
  %v2216 = vmul.f32 %v2184, %v2156
  %v2217 = vmul.f32 %v2185, %v2156
  %v2218 = vmul.f32 %v2186, %v2157
  %v2219 = vmul.f32 %v2187, %v2157
  %v2220 = vmul.f32 %v2188, %v2158
  %v2221 = vmul.f32 %v2189, %v2158
  %v2222 = vmul.f32 %v2190, %v2159
  %v2223 = vmul.f32 %v2191, %v2159
  %2225 = vset.pattern.permute.xlu0 0
  %2226 = vperm.xlu0 %2225, %v129
  %v2227 = vpop.permute.xlu0 %2226
  %2230 = vset.pattern.permute.xlu0 0
  %2231 = vperm.xlu0 %2230, %v130
  %v2232 = vpop.permute.xlu0 %2231
  %2235 = vset.pattern.permute.xlu0 0
  %2236 = vperm.xlu0 %2235, %v131
  %v2237 = vpop.permute.xlu0 %2236
  %2240 = vset.pattern.permute.xlu0 0
  %2241 = vperm.xlu0 %2240, %v132
  %v2242 = vpop.permute.xlu0 %2241
  %2245 = vset.pattern.permute.xlu0 0
  %2246 = vperm.xlu0 %2245, %v133
  %v2247 = vpop.permute.xlu0 %2246
  %2250 = vset.pattern.permute.xlu0 0
  %2251 = vperm.xlu0 %2250, %v134
  %v2252 = vpop.permute.xlu0 %2251
  %2255 = vset.pattern.permute.xlu0 0
  %2256 = vperm.xlu0 %2255, %v135
  %v2257 = vpop.permute.xlu0 %2256
  %2260 = vset.pattern.permute.xlu0 0
  %2261 = vperm.xlu0 %2260, %v136
  %v2262 = vpop.permute.xlu0 %2261
  %2265 = vset.pattern.permute.xlu0 0
  %2266 = vperm.xlu0 %2265, %v137
  %v2267 = vpop.permute.xlu0 %2266
  %2270 = vset.pattern.permute.xlu0 0
  %2271 = vperm.xlu0 %2270, %v138
  %v2272 = vpop.permute.xlu0 %2271
  %2275 = vset.pattern.permute.xlu0 0
  %2276 = vperm.xlu0 %2275, %v139
  %v2277 = vpop.permute.xlu0 %2276
  %2280 = vset.pattern.permute.xlu0 0
  %2281 = vperm.xlu0 %2280, %v140
  %v2282 = vpop.permute.xlu0 %2281
  %2285 = vset.pattern.permute.xlu0 0
  %2286 = vperm.xlu0 %2285, %v141
  %v2287 = vpop.permute.xlu0 %2286
  %2290 = vset.pattern.permute.xlu0 0
  %2291 = vperm.xlu0 %2290, %v142
  %v2292 = vpop.permute.xlu0 %2291
  %2295 = vset.pattern.permute.xlu0 0
  %2296 = vperm.xlu0 %2295, %v143
  %v2297 = vpop.permute.xlu0 %2296
  %2300 = vset.pattern.permute.xlu0 0
  %2301 = vperm.xlu0 %2300, %v144
  %v2302 = vpop.permute.xlu0 %2301
  %v2304 = vmul.f32 %v2192, %v2227
  %v2305 = vmul.f32 %v2193, %v2227
  %v2306 = vmul.f32 %v2194, %v2232
  %v2307 = vmul.f32 %v2195, %v2232
  %v2308 = vmul.f32 %v2196, %v2237
  %v2309 = vmul.f32 %v2197, %v2237
  %v2310 = vmul.f32 %v2198, %v2242
  %v2311 = vmul.f32 %v2199, %v2242
  %v2312 = vmul.f32 %v2200, %v2247
  %v2313 = vmul.f32 %v2201, %v2247
  %v2314 = vmul.f32 %v2202, %v2252
  %v2315 = vmul.f32 %v2203, %v2252
  %v2316 = vmul.f32 %v2204, %v2257
  %v2317 = vmul.f32 %v2205, %v2257
  %v2318 = vmul.f32 %v2206, %v2262
  %v2319 = vmul.f32 %v2207, %v2262
  %v2320 = vmul.f32 %v2208, %v2267
  %v2321 = vmul.f32 %v2209, %v2267
  %v2322 = vmul.f32 %v2210, %v2272
  %v2323 = vmul.f32 %v2211, %v2272
  %v2324 = vmul.f32 %v2212, %v2277
  %v2325 = vmul.f32 %v2213, %v2277
  %v2326 = vmul.f32 %v2214, %v2282
  %v2327 = vmul.f32 %v2215, %v2282
  %v2328 = vmul.f32 %v2216, %v2287
  %v2329 = vmul.f32 %v2217, %v2287
  %v2330 = vmul.f32 %v2218, %v2292
  %v2331 = vmul.f32 %v2219, %v2292
  %v2332 = vmul.f32 %v2220, %v2297
  %v2333 = vmul.f32 %v2221, %v2297
  %v2334 = vmul.f32 %v2222, %v2302
  %v2335 = vmul.f32 %v2223, %v2302
  %2337 = vset.pattern.permute.xlu0 0
  %2338 = vperm.xlu0 %2337, %v145
  %v2339 = vpop.permute.xlu0 %2338
  %2342 = vset.pattern.permute.xlu0 0
  %2343 = vperm.xlu0 %2342, %v146
  %v2344 = vpop.permute.xlu0 %2343
  %2347 = vset.pattern.permute.xlu0 0
  %2348 = vperm.xlu0 %2347, %v147
  %v2349 = vpop.permute.xlu0 %2348
  %2352 = vset.pattern.permute.xlu0 0
  %2353 = vperm.xlu0 %2352, %v148
  %v2354 = vpop.permute.xlu0 %2353
  %2357 = vset.pattern.permute.xlu0 0
  %2358 = vperm.xlu0 %2357, %v149
  %v2359 = vpop.permute.xlu0 %2358
  %2362 = vset.pattern.permute.xlu0 0
  %2363 = vperm.xlu0 %2362, %v150
  %v2364 = vpop.permute.xlu0 %2363
  %2367 = vset.pattern.permute.xlu0 0
  %2368 = vperm.xlu0 %2367, %v151
  %v2369 = vpop.permute.xlu0 %2368
  %2372 = vset.pattern.permute.xlu0 0
  %2373 = vperm.xlu0 %2372, %v152
  %v2374 = vpop.permute.xlu0 %2373
  %2377 = vset.pattern.permute.xlu0 0
  %2378 = vperm.xlu0 %2377, %v153
  %v2379 = vpop.permute.xlu0 %2378
  %2382 = vset.pattern.permute.xlu0 0
  %2383 = vperm.xlu0 %2382, %v154
  %v2384 = vpop.permute.xlu0 %2383
  %2387 = vset.pattern.permute.xlu0 0
  %2388 = vperm.xlu0 %2387, %v155
  %v2389 = vpop.permute.xlu0 %2388
  %2392 = vset.pattern.permute.xlu0 0
  %2393 = vperm.xlu0 %2392, %v156
  %v2394 = vpop.permute.xlu0 %2393
  %2397 = vset.pattern.permute.xlu0 0
  %2398 = vperm.xlu0 %2397, %v157
  %v2399 = vpop.permute.xlu0 %2398
  %2402 = vset.pattern.permute.xlu0 0
  %2403 = vperm.xlu0 %2402, %v158
  %v2404 = vpop.permute.xlu0 %2403
  %2407 = vset.pattern.permute.xlu0 0
  %2408 = vperm.xlu0 %2407, %v159
  %v2409 = vpop.permute.xlu0 %2408
  %2412 = vset.pattern.permute.xlu0 0
  %2413 = vperm.xlu0 %2412, %v160
  %v2414 = vpop.permute.xlu0 %2413
  %v2416 = vadd.f32 %v2304, %v2339
  %v2417 = vadd.f32 %v2305, %v2339
  %v2418 = vadd.f32 %v2306, %v2344
  %v2419 = vadd.f32 %v2307, %v2344
  %v2420 = vadd.f32 %v2308, %v2349
  %v2421 = vadd.f32 %v2309, %v2349
  %v2422 = vadd.f32 %v2310, %v2354
  %v2423 = vadd.f32 %v2311, %v2354
  %v2424 = vadd.f32 %v2312, %v2359
  %v2425 = vadd.f32 %v2313, %v2359
  %v2426 = vadd.f32 %v2314, %v2364
  %v2427 = vadd.f32 %v2315, %v2364
  %v2428 = vadd.f32 %v2316, %v2369
  %v2429 = vadd.f32 %v2317, %v2369
  %v2430 = vadd.f32 %v2318, %v2374
  %v2431 = vadd.f32 %v2319, %v2374
  %v2432 = vadd.f32 %v2320, %v2379
  %v2433 = vadd.f32 %v2321, %v2379
  %v2434 = vadd.f32 %v2322, %v2384
  %v2435 = vadd.f32 %v2323, %v2384
  %v2436 = vadd.f32 %v2324, %v2389
  %v2437 = vadd.f32 %v2325, %v2389
  %v2438 = vadd.f32 %v2326, %v2394
  %v2439 = vadd.f32 %v2327, %v2394
  %v2440 = vadd.f32 %v2328, %v2399
  %v2441 = vadd.f32 %v2329, %v2399
  %v2442 = vadd.f32 %v2330, %v2404
  %v2443 = vadd.f32 %v2331, %v2404
  %v2444 = vadd.f32 %v2332, %v2409
  %v2445 = vadd.f32 %v2333, %v2409
  %v2446 = vadd.f32 %v2334, %v2414
  %v2447 = vadd.f32 %v2335, %v2414
  %v2448 = vmax.f32 %v2416, 0.0
  %v2449 = vmax.f32 %v2417, 0.0
  %v2450 = vmax.f32 %v2418, 0.0
  %v2451 = vmax.f32 %v2419, 0.0
  %v2452 = vmax.f32 %v2420, 0.0
  %v2453 = vmax.f32 %v2421, 0.0
  %v2454 = vmax.f32 %v2422, 0.0
  %v2455 = vmax.f32 %v2423, 0.0
  %v2456 = vmax.f32 %v2424, 0.0
  %v2457 = vmax.f32 %v2425, 0.0
  %v2458 = vmax.f32 %v2426, 0.0
  %v2459 = vmax.f32 %v2427, 0.0
  %v2460 = vmax.f32 %v2428, 0.0
  %v2461 = vmax.f32 %v2429, 0.0
  %v2462 = vmax.f32 %v2430, 0.0
  %v2463 = vmax.f32 %v2431, 0.0
  %v2464 = vmax.f32 %v2432, 0.0
  %v2465 = vmax.f32 %v2433, 0.0
  %v2466 = vmax.f32 %v2434, 0.0
  %v2467 = vmax.f32 %v2435, 0.0
  %v2468 = vmax.f32 %v2436, 0.0
  %v2469 = vmax.f32 %v2437, 0.0
  %v2470 = vmax.f32 %v2438, 0.0
  %v2471 = vmax.f32 %v2439, 0.0
  %v2472 = vmax.f32 %v2440, 0.0
  %v2473 = vmax.f32 %v2441, 0.0
  %v2474 = vmax.f32 %v2442, 0.0
  %v2475 = vmax.f32 %v2443, 0.0
  %v2476 = vmax.f32 %v2444, 0.0
  %v2477 = vmax.f32 %v2445, 0.0
  %v2478 = vmax.f32 %v2446, 0.0
  %v2479 = vmax.f32 %v2447, 0.0
  %v2480 = vadd.f32 %v29, %v2448
  %v2481 = vadd.f32 %v30, %v2449
  %v2482 = vadd.f32 %v31, %v2450
  %v2483 = vadd.f32 %v32, %v2451
  %v2484 = vadd.f32 %v33, %v2452
  %v2485 = vadd.f32 %v34, %v2453
  %v2486 = vadd.f32 %v35, %v2454
  %v2487 = vadd.f32 %v36, %v2455
  %v2488 = vadd.f32 %v37, %v2456
  %v2489 = vadd.f32 %v38, %v2457
  %v2490 = vadd.f32 %v39, %v2458
  %v2491 = vadd.f32 %v40, %v2459
  %v2492 = vadd.f32 %v41, %v2460
  %v2493 = vadd.f32 %v42, %v2461
  %v2494 = vadd.f32 %v43, %v2462
  %v2495 = vadd.f32 %v44, %v2463
  %v2496 = vadd.f32 %v45, %v2464
  %v2497 = vadd.f32 %v46, %v2465
  %v2498 = vadd.f32 %v47, %v2466
  %v2499 = vadd.f32 %v48, %v2467
  %v2500 = vadd.f32 %v49, %v2468
  %v2501 = vadd.f32 %v50, %v2469
  %v2502 = vadd.f32 %v51, %v2470
  %v2503 = vadd.f32 %v52, %v2471
  %v2504 = vadd.f32 %v53, %v2472
  %v2505 = vadd.f32 %v54, %v2473
  %v2506 = vadd.f32 %v55, %v2474
  %v2507 = vadd.f32 %v56, %v2475
  %v2508 = vadd.f32 %v57, %v2476
  %v2509 = vadd.f32 %v58, %v2477
  %v2510 = vadd.f32 %v59, %v2478
  %v2511 = vadd.f32 %v60, %v2479
  %2512 = vst [vmem:[%s8] sm:$0xff] %v2480
  %2513 = vst [vmem:[%s8 + $0x8] sm:$0xff] %v2481
  %2514 = vst [vmem:[%s8 + $0x10] sm:$0xff] %v2482
  %2515 = vst [vmem:[%s8 + $0x18] sm:$0xff] %v2483
  %2516 = vst [vmem:[%s8 + $0x20] sm:$0xff] %v2484
  %2517 = vst [vmem:[%s8 + $0x28] sm:$0xff] %v2485
  %2518 = vst [vmem:[%s8 + $0x30] sm:$0xff] %v2486
  %2519 = vst [vmem:[%s8 + $0x38] sm:$0xff] %v2487
  %2520 = vst [vmem:[%s8 + $0x40] sm:$0xff] %v2488
  %2521 = vst [vmem:[%s8 + $0x48] sm:$0xff] %v2489
  %2522 = vst [vmem:[%s8 + $0x50] sm:$0xff] %v2490
  %2523 = vst [vmem:[%s8 + $0x58] sm:$0xff] %v2491
  %2524 = vst [vmem:[%s8 + $0x60] sm:$0xff] %v2492
  %2525 = vst [vmem:[%s8 + $0x68] sm:$0xff] %v2493
  %2526 = vst [vmem:[%s8 + $0x70] sm:$0xff] %v2494
  %2527 = vst [vmem:[%s8 + $0x78] sm:$0xff] %v2495
  %2528 = vst [vmem:[%s8 + $0x80] sm:$0xff] %v2496
  %2529 = vst [vmem:[%s8 + $0x88] sm:$0xff] %v2497
  %2530 = vst [vmem:[%s8 + $0x90] sm:$0xff] %v2498
  %2531 = vst [vmem:[%s8 + $0x98] sm:$0xff] %v2499
  %2532 = vst [vmem:[%s8 + $0xa0] sm:$0xff] %v2500
  %2533 = vst [vmem:[%s8 + $0xa8] sm:$0xff] %v2501
  %2534 = vst [vmem:[%s8 + $0xb0] sm:$0xff] %v2502
  %2535 = vst [vmem:[%s8 + $0xb8] sm:$0xff] %v2503
  %2536 = vst [vmem:[%s8 + $0xc0] sm:$0xff] %v2504
  %2537 = vst [vmem:[%s8 + $0xc8] sm:$0xff] %v2505
  %2538 = vst [vmem:[%s8 + $0xd0] sm:$0xff] %v2506
  %2539 = vst [vmem:[%s8 + $0xd8] sm:$0xff] %v2507
  %2540 = vst [vmem:[%s8 + $0xe0] sm:$0xff] %v2508
  %2541 = vst [vmem:[%s8 + $0xe8] sm:$0xff] %v2509
  %2542 = vst [vmem:[%s8 + $0xf0] sm:$0xff] %v2510
  %2543 = vst [vmem:[%s8 + $0xf8] sm:$0xff] %v2511
  // Predicated region
  $region34: #{sa_layer.1} parent=0 // pred_check
    _
  $region35: #{sa_layer.1} parent=0 // pred_check_branch
    %2545 = sbr.rel (0) target = $region37
  $region36: #{sa_layer.1} parent=0 // pred_region
    _
  $region37: #{sa_layer.1} parent=0 // pred_fallthru
    _
  // Predicated region
  $region38: #{sa_layer.1} parent=0 // pred_check
    _
  $region39: #{sa_layer.1} parent=0 // pred_check_branch
    %2547 = sbr.rel (0) target = $region41
  $region40: #{sa_layer.1} parent=0 // pred_region
    _
  $region41: #{sa_layer.1} parent=0 // pred_fallthru
    _

</llo_original>
